<compile_context>
chip_gen: v6e
topology: v6e:2x2x1
jax: 0.10.0
libtpu: 0.0.40
codegen_flags: <defaults>
</compile_context>

<pallas_src>
import functools

import jax
import jax.numpy as jnp
from jax.experimental import pallas as pl
from jax.experimental.pallas import tpu as pltpu

HIDDEN = 768        # encoder hidden size (module's self.hidden_size)
EMB_DIM = 300       # width of the external `embeddings` input  (Linear(2*768 + 300, T))
EMB_PAD = 384       # 300 -> 3 * 128 lanes
OUT_PAD = 128       # classifier output padded to one full lane group (lane-dense store)
ENC_FEAT = 256      # synthetic-encoder token-feature width


def _gelu_f32(x):
    # tanh-approx GELU, f32 epilogue (tanh -> EUP, adds/muls -> VPU; free slots under the MXU).
    c = 0.7978845608028654  # sqrt(2 / pi)
    return 0.5 * x * (1.0 + jnp.tanh(c * (x + 0.044715 * x * x * x)))


def _fused_forward_kernel(
    maskw_ref,     # (B_PAD, S, 1)         f32   mask / valid-token-count pooling weights
    feats_ref,     # (B_PAD, S, ENC_FEAT)  bf16  gathered token + token-type features
    w_heads_ref,   # (ENC_FEAT, 2*HIDDEN)  bf16  fused [aux | main] encoder heads
    b_heads_ref,   # (1, 2*HIDDEN)         f32
    emb_ref,       # (B_PAD, EMB_PAD)      bf16  external embeddings, lane-padded 300 -> 384
    wc_cls_ref,    # (2*HIDDEN, OUT_PAD)   bf16  classifier rows [0:768] (aux) ++ [1068:1836] (main)
    wc_emb_ref,    # (EMB_PAD, OUT_PAD)    bf16  classifier rows [768:1068] (K zero-padded)
    bc_ref,        # (1, OUT_PAD)          f32   classifier bias
    out_ref,       # (B_PAD, OUT_PAD)      f32   padded logits
):
    # --- masked mean pooling, per batch row: VPU lane-broadcast multiply + sublane reduce.
    #     No O(B^2*S) pooling matrix; scales linearly with B*S. ---
    weighted = feats_ref[...].astype(jnp.float32) * maskw_ref[...]       # (B, S, F) f32
    pooled = jnp.sum(weighted, axis=1)                                   # (B, F)    f32
    pooled_bf = pooled.astype(jnp.bfloat16)

    # --- fused encoder "CLS" heads: ONE bf16 MXU matmul over [aux | main], f32 bias + GELU ---
    cls = _gelu_f32(
        jnp.dot(pooled_bf, w_heads_ref[...], preferred_element_type=jnp.float32)
        + b_heads_ref[...])                                              # (B, 2*HIDDEN) f32

    # --- classifier: concat([aux_cls, embeddings, main_cls]) @ W + b as two partial matmuls
    #     into one f32 accumulator (mathematically identical, no lane-unaligned concat).
    #     Eval-mode dropout is identity -> removed. ---
    acc = jnp.dot(cls.astype(jnp.bfloat16), wc_cls_ref[...],
                  preferred_element_type=jnp.float32)
    acc = acc + jnp.dot(emb_ref[...], wc_emb_ref[...],
                        preferred_element_type=jnp.float32)
    out_ref[...] = acc + bc_ref[...]                                     # lane-dense (B_PAD, 128)


def _pad_rows(x, rows):
    return jnp.pad(x, ((0, rows - x.shape[0]),) + ((0, 0),) * (x.ndim - 1))


def prepare_params(params):
    """One-time weight prep (slicing, padding, bf16 casts) hoisted OUT of the per-call path."""
    num_labels = params["b_lin"].shape[0]
    pad_n = OUT_PAD - num_labels
    w_lin, b_lin = params["w_lin"], params["b_lin"]

    # Fused encoder heads: [aux | main] along the output axis.
    w_heads = jnp.concatenate([params["w_aux"], params["w_main"]], axis=1).astype(jnp.bfloat16)
    b_heads = jnp.concatenate([params["b_aux"], params["b_main"]]
                              ).reshape(1, 2 * HIDDEN).astype(jnp.float32)

    # Classifier weight split at input offsets 0 / 768 / 1068, with the aux+main slabs fused.
    wc_cls = jnp.pad(jnp.concatenate([w_lin[:HIDDEN], w_lin[HIDDEN + EMB_DIM:]], axis=0),
                     ((0, 0), (0, pad_n))).astype(jnp.bfloat16)          # (2*HIDDEN, OUT_PAD)
    wc_emb = jnp.pad(w_lin[HIDDEN:HIDDEN + EMB_DIM],
                     ((0, EMB_PAD - EMB_DIM), (0, pad_n))).astype(jnp.bfloat16)
    bc = jnp.pad(b_lin, (0, pad_n)).reshape(1, OUT_PAD).astype(jnp.float32)

    return {
        "tok_table": params["tok_table"],
        "type_table": params["type_table"],
        "w_heads": w_heads, "b_heads": b_heads,
        "wc_cls": wc_cls, "wc_emb": wc_emb, "bc": bc,
    }


@functools.partial(jax.jit, static_argnames=("num_labels",))
def model_forward(prepared, ids, mask, token_type_ids, embeddings, *, num_labels):
    """JAX equivalent of ModelClass.forward (eval mode), with synthetic encoder stand-ins."""
    b, s = ids.shape
    b_pad = max(8, -(-b // 8) * 8)   # batch rows padded to a sublane-group multiple

    # ---- synthetic-encoder embedding lookup: gather only B*S rows (never the whole table) ----
    feats = prepared["tok_table"][ids] + prepared["type_table"][token_type_ids]  # (B, S, F) f32
    feats = _pad_rows(feats, b_pad).astype(jnp.bfloat16)                          # (B_PAD, S, F)

    # ---- mask-normalized pooling weights (mean over valid tokens), padded rows are all-zero ----
    maskf = _pad_rows(mask.astype(jnp.float32), b_pad)                            # (B_PAD, S)
    denom = jnp.maximum(jnp.sum(maskf, axis=1, keepdims=True), 1.0)
    maskw = (maskf / denom)[:, :, None]                                           # (B_PAD, S, 1)

    emb = _pad_rows(embeddings.astype(jnp.float32), b_pad)
    emb = jnp.pad(emb, ((0, 0), (0, EMB_PAD - EMB_DIM))).astype(jnp.bfloat16)     # (B_PAD, EMB_PAD)

    inputs = (maskw, feats, prepared["w_heads"], prepared["b_heads"],
              emb, prepared["wc_cls"], prepared["wc_emb"], prepared["bc"])

    # Single step: no grid, no pipelining -> no redundant double-buffer VMEM copies.
    vmem_spec = pl.BlockSpec(memory_space=pltpu.MemorySpace.VMEM)
    logits_pad = pl.pallas_call(
        _fused_forward_kernel,
        out_shape=jax.ShapeDtypeStruct((b_pad, OUT_PAD), jnp.float32),
        in_specs=[vmem_spec] * len(inputs),
        out_specs=vmem_spec,
    )(*inputs)

    return logits_pad[:b, :num_labels]


def init_params(key, vocab_size=64, type_vocab_size=2, num_labels=3):
    ks = jax.random.split(key, 8)
    concat_dim = 2 * HIDDEN + EMB_DIM   # 1836, exactly as in the torch Linear
    return {
        "tok_table":  jax.random.normal(ks[0], (vocab_size, ENC_FEAT), jnp.float32),
        "type_table": jax.random.normal(ks[1], (type_vocab_size, ENC_FEAT), jnp.float32),
        "w_aux":  jax.random.normal(ks[2], (ENC_FEAT, HIDDEN), jnp.float32) * (ENC_FEAT ** -0.5),
        "b_aux":  jax.random.normal(ks[3], (HIDDEN,), jnp.float32) * 0.02,
        "w_main": jax.random.normal(ks[4], (ENC_FEAT, HIDDEN), jnp.float32) * (ENC_FEAT ** -0.5),
        "b_main": jax.random.normal(ks[5], (HIDDEN,), jnp.float32) * 0.02,
        "w_lin":  jax.random.normal(ks[6], (concat_dim, num_labels), jnp.float32) * (concat_dim ** -0.5),
        "b_lin":  jax.random.normal(ks[7], (num_labels,), jnp.float32) * 0.02,
    }


def reference_forward(params, ids, mask, token_type_ids, embeddings):
    """Pure-JAX reference with the same dtype choreography (numeric sanity check)."""
    feats = (params["tok_table"][ids] + params["type_table"][token_type_ids])
    feats = feats.astype(jnp.bfloat16).astype(jnp.float32)                        # ship-as-bf16 parity
    maskf = mask.astype(jnp.float32)
    denom = jnp.maximum(jnp.sum(maskf, axis=1, keepdims=True), 1.0)
    pooled = jnp.einsum("bs,bsd->bd", maskf / denom, feats)
    pooled_bf = pooled.astype(jnp.bfloat16)

    def head(w, bias):
        h = jnp.dot(pooled_bf, w.astype(jnp.bfloat16),
                    preferred_element_type=jnp.float32) + bias.astype(jnp.float32)
        return _gelu_f32(h)

    aux_cls = head(params["w_aux"], params["b_aux"])
    main_cls = head(params["w_main"], params["b_main"])
    # concat([aux_cls, embeddings, main_cls]) -> (eval-mode dropout = identity) -> Linear
    x = jnp.concatenate([aux_cls, embeddings.astype(jnp.float32), main_cls], axis=1)
    logits = jnp.dot(x.astype(jnp.bfloat16), params["w_lin"].astype(jnp.bfloat16),
                     preferred_element_type=jnp.float32) + params["b_lin"]
    return logits


if __name__ == "__main__":
    key = jax.random.PRNGKey(0)
    k_ids, k_tt, k_emb, k_params = jax.random.split(key, 4)

    batch, seq = 2, 8
    vocab, type_vocab, num_labels = 64, 2, 3

    ids = jax.random.randint(k_ids, (batch, seq), 0, vocab, dtype=jnp.int32)
    token_type_ids = jax.random.randint(k_tt, (batch, seq), 0, type_vocab, dtype=jnp.int32)
    mask = jnp.array([[1, 1, 1, 1, 1, 1, 1, 1],
                      [1, 1, 1, 1, 1, 0, 0, 0]], dtype=jnp.int32)
    embeddings = jax.random.normal(k_emb, (batch, EMB_DIM), jnp.float32)

    params = init_params(k_params, vocab, type_vocab, num_labels)
    prepared = prepare_params(params)   # one-time weight padding / bf16 casts (hoisted)

    logits = jax.block_until_ready(
        model_forward(prepared, ids, mask, token_type_ids, embeddings, num_labels=num_labels))

    ref = reference_forward(params, ids, mask, token_type_ids, embeddings)
    assert logits.shape == (batch, num_labels)
    assert jnp.allclose(logits, ref, atol=5e-2, rtol=5e-2)

    print("KERNEL_OK")
</pallas_src>

<mosaic_0001>
module attributes {stable_mosaic.version = 11 : i64} {
  func.func @_fused_forward_kernel(%arg0: memref<8x8x1xf32, #tpu.memory_space<vmem>>, %arg1: memref<8x8x256xbf16, #tpu.memory_space<vmem>>, %arg2: memref<256x1536xbf16, #tpu.memory_space<vmem>>, %arg3: memref<1x1536xf32, #tpu.memory_space<vmem>>, %arg4: memref<8x384xbf16, #tpu.memory_space<vmem>>, %arg5: memref<1536x128xbf16, #tpu.memory_space<vmem>>, %arg6: memref<384x128xbf16, #tpu.memory_space<vmem>>, %arg7: memref<1x128xf32, #tpu.memory_space<vmem>>, %arg8: memref<8x128xf32, #tpu.memory_space<vmem>>) attributes {dimension_semantics = [], scalar_prefetch = 0 : i64, scratch_operands = 0 : i64, tpu.core_type = #tpu.core_type<tc>} {
    %c0 = arith.constant 0 : index
    %c0_0 = arith.constant 0 : index
    %c0_1 = arith.constant 0 : index
    %0 = vector.load %arg1[%c0, %c0_0, %c0_1] : memref<8x8x256xbf16, #tpu.memory_space<vmem>>, vector<8x8x256xbf16>
    %1 = arith.extf %0 : vector<8x8x256xbf16> to vector<8x8x256xf32>
    %c0_2 = arith.constant 0 : index
    %c0_3 = arith.constant 0 : index
    %c0_4 = arith.constant 0 : index
    %2 = vector.load %arg0[%c0_2, %c0_3, %c0_4] : memref<8x8x1xf32, #tpu.memory_space<vmem>>, vector<8x8x1xf32>
    %3 = vector.broadcast %2 : vector<8x8x1xf32> to vector<8x8x256xf32>
    %4 = arith.mulf %1, %3 : vector<8x8x256xf32>
    %cst = arith.constant dense<0.000000e+00> : vector<8x256xf32>
    %5 = vector.multi_reduction <add>, %4, %cst [1] : vector<8x8x256xf32> to vector<8x256xf32>
    %6 = arith.truncf %5 : vector<8x256xf32> to vector<8x256xbf16>
    %c0_5 = arith.constant 0 : index
    %c0_6 = arith.constant 0 : index
    %7 = vector.load %arg2[%c0_5, %c0_6] : memref<256x1536xbf16, #tpu.memory_space<vmem>>, vector<256x1536xbf16>
    %cst_7 = arith.constant dense<0.000000e+00> : vector<8x1536xf32>
    %8 = tpu.matmul %6, %7, %cst_7 {dimension_numbers = #tpu.dot_dimension_numbers<[1], [0], [0], [1], [0, 0, 1, 1], [], []>} : vector<8x256xbf16>, vector<256x1536xbf16>, vector<8x1536xf32> -> vector<8x1536xf32>
    %c0_8 = arith.constant 0 : index
    %c0_9 = arith.constant 0 : index
    %9 = vector.load %arg3[%c0_8, %c0_9] : memref<1x1536xf32, #tpu.memory_space<vmem>>, vector<1x1536xf32>
    %10 = vector.broadcast %9 : vector<1x1536xf32> to vector<8x1536xf32>
    %11 = arith.addf %8, %10 : vector<8x1536xf32>
    %cst_10 = arith.constant 5.000000e-01 : f32
    %12 = vector.broadcast %cst_10 : f32 to vector<8x1536xf32>
    %13 = arith.mulf %12, %11 : vector<8x1536xf32>
    %cst_11 = arith.constant 4.471500e-02 : f32
    %14 = vector.broadcast %cst_11 : f32 to vector<8x1536xf32>
    %15 = arith.mulf %14, %11 : vector<8x1536xf32>
    %16 = arith.mulf %15, %11 : vector<8x1536xf32>
    %17 = arith.mulf %16, %11 : vector<8x1536xf32>
    %18 = arith.addf %11, %17 : vector<8x1536xf32>
    %cst_12 = arith.constant 0.797884583 : f32
    %19 = vector.broadcast %cst_12 : f32 to vector<8x1536xf32>
    %20 = arith.mulf %19, %18 : vector<8x1536xf32>
    %21 = math.tanh %20 : vector<8x1536xf32>
    %cst_13 = arith.constant 1.000000e+00 : f32
    %22 = vector.broadcast %cst_13 : f32 to vector<8x1536xf32>
    %23 = arith.addf %22, %21 : vector<8x1536xf32>
    %24 = arith.mulf %13, %23 : vector<8x1536xf32>
    %25 = arith.truncf %24 : vector<8x1536xf32> to vector<8x1536xbf16>
    %c0_14 = arith.constant 0 : index
    %c0_15 = arith.constant 0 : index
    %26 = vector.load %arg5[%c0_14, %c0_15] : memref<1536x128xbf16, #tpu.memory_space<vmem>>, vector<1536x128xbf16>
    %cst_16 = arith.constant dense<0.000000e+00> : vector<8x128xf32>
    %27 = tpu.matmul %25, %26, %cst_16 {dimension_numbers = #tpu.dot_dimension_numbers<[1], [0], [0], [1], [0, 0, 1, 1], [], []>} : vector<8x1536xbf16>, vector<1536x128xbf16>, vector<8x128xf32> -> vector<8x128xf32>
    %c0_17 = arith.constant 0 : index
    %c0_18 = arith.constant 0 : index
    %28 = vector.load %arg4[%c0_17, %c0_18] : memref<8x384xbf16, #tpu.memory_space<vmem>>, vector<8x384xbf16>
    %c0_19 = arith.constant 0 : index
    %c0_20 = arith.constant 0 : index
    %29 = vector.load %arg6[%c0_19, %c0_20] : memref<384x128xbf16, #tpu.memory_space<vmem>>, vector<384x128xbf16>
    %cst_21 = arith.constant dense<0.000000e+00> : vector<8x128xf32>
    %30 = tpu.matmul %28, %29, %cst_21 {dimension_numbers = #tpu.dot_dimension_numbers<[1], [0], [0], [1], [0, 0, 1, 1], [], []>} : vector<8x384xbf16>, vector<384x128xbf16>, vector<8x128xf32> -> vector<8x128xf32>
    %31 = arith.addf %27, %30 : vector<8x128xf32>
    %c0_22 = arith.constant 0 : index
    %c0_23 = arith.constant 0 : index
    %32 = vector.load %arg7[%c0_22, %c0_23] : memref<1x128xf32, #tpu.memory_space<vmem>>, vector<1x128xf32>
    %33 = vector.broadcast %32 : vector<1x128xf32> to vector<8x128xf32>
    %34 = arith.addf %31, %33 : vector<8x128xf32>
    %c0_24 = arith.constant 0 : index
    %c0_25 = arith.constant 0 : index
    %35 = vector.load %arg8[%c0_24, %c0_25] : memref<8x128xf32, #tpu.memory_space<vmem>>, vector<8x128xf32>
    tpu.vector_store %arg8[%c0_24, %c0_25], %34 {strides = array<i32>} : memref<8x128xf32, #tpu.memory_space<vmem>>, vector<8x128xf32>,
    return
  }
}

</mosaic_0001>

<llo_original>
// kernel: model_forward.1
$region0: #{model_forward.1}
  #allocation0 [shape = 'u32[]', space=smem, size = 0x4, offset = 0x4, fixed_abs, tag = 'smem constant byte address 0x4 - core index']
  #allocation1 [shape = 'u32[144,128]{1,0:T(1,128)}', space=vmem, size = 0x12000, scoped, tag = 'internal scratch']
  %s0 = inlined_call_operand.vmem [shape: f32[8,8,1], index: 0, kind: input, shape index: {}]
  %s1 = inlined_call_operand.vmem [shape: bf16[8,8,256], index: 1, kind: input, shape index: {}]
  %s2 = inlined_call_operand.hbm [shape: bf16[256,1536], index: 2, kind: input, shape index: {}]
  %s3 = inlined_call_operand.vmem [shape: f32[1,1536], index: 3, kind: input, shape index: {}]
  %s4 = inlined_call_operand.vmem [shape: bf16[8,384], index: 4, kind: input, shape index: {}]
  %s5 = inlined_call_operand.vmem [shape: bf16[1536,128], index: 5, kind: input, shape index: {}]
  %s6 = inlined_call_operand.hbm [shape: bf16[384,128], index: 6, kind: input, shape index: {}]
  %s7 = inlined_call_operand.vmem [shape: f32[1,128], index: 7, kind: input, shape index: {}]
  %s8 = inlined_call_operand.vmem [shape: f32[8,128], index: 8, kind: output, shape index: {}]
  %s9 = sld [smem:[#allocation0]]
  $region50: #{model_forward.1} parent=0
    _
  %s11 = ssub.s32 1, %s9
  %s12 = scalar_select 0, %s11, %s9
  $region1: #{model_forward.1} parent=0
    #allocation2 [shape = 'u8[786432]{0}', space=vmem, size = 0xc0000, scoped, tag = 'input window, operand 2, single buffered']
    #allocation3 [shape = 's32[1]{0}', space=sflag, size = 0x4, scoped, tag = 'scoped memory for model_forward.1']
    #allocation4 [shape = 'u8[98304]{0}', space=vmem, size = 0x18000, scoped, tag = 'input window, operand 6, single buffered']
    #allocation5 [shape = 's32[1]{0}', space=sflag, size = 0x4, scoped, tag = 'scoped memory for model_forward.1']
    %13 = vsyncpa [#allocation3], 0
    %14 = vsyncpa [#allocation5], 0
    // Predicated region
    $region2: #{model_forward.1} parent=1 // pred_check
      _
    $region3: #{model_forward.1} parent=1 // pred_check_branch
      %16 = sbr.rel (0) target = $region5
    $region4: #{model_forward.1} parent=1 // pred_region
      _
    $region5: #{model_forward.1} parent=1 // pred_fallthru
      _
    // Predicated region
    $region6: #{model_forward.1} parent=1 // pred_check
      _
    $region7: #{model_forward.1} parent=1 // pred_check_branch
      %18 = sbr.rel (0) target = $region9
    $region8: #{model_forward.1} parent=1 // pred_region
      _
    $region9: #{model_forward.1} parent=1 // pred_fallthru
      _
    // Predicated region
    $region10: #{model_forward.1} parent=1 // pred_check
      _
    $region11: #{model_forward.1} parent=1 // pred_check_branch
      %20 = sbr.rel (0) target = $region13
    $region12: #{model_forward.1} parent=1 // pred_region
      %s22 = ssub.s32 24576, 24576
      %23 = vsyncadd [#allocation3], %s22
      %s24 = sshll.u32 [#allocation2], 4
      %s25 = int_to_ptr.vmem [resolvable:$true] %s24
      %30 = dma.hbm_to_vmem [thread:$0]  %s2, 24576, %s25, [#allocation3], 768, 768, 48
    $region13: #{model_forward.1} parent=1 // pred_fallthru
      _
    // Predicated region
    $region14: #{model_forward.1} parent=1 // pred_check
      _
    $region15: #{model_forward.1} parent=1 // pred_check_branch
      %32 = sbr.rel (0) target = $region17
    $region16: #{model_forward.1} parent=1 // pred_region
      _
    $region17: #{model_forward.1} parent=1 // pred_fallthru
      _
    // Predicated region
    $region18: #{model_forward.1} parent=1 // pred_check
      _
    $region19: #{model_forward.1} parent=1 // pred_check_branch
      %34 = sbr.rel (0) target = $region21
    $region20: #{model_forward.1} parent=1 // pred_region
      _
    $region21: #{model_forward.1} parent=1 // pred_fallthru
      _
    // Predicated region
    $region22: #{model_forward.1} parent=1 // pred_check
      _
    $region23: #{model_forward.1} parent=1 // pred_check_branch
      %36 = sbr.rel (0) target = $region25
    $region24: #{model_forward.1} parent=1 // pred_region
      _
    $region25: #{model_forward.1} parent=1 // pred_fallthru
      _
    // Predicated region
    $region26: #{model_forward.1} parent=1 // pred_check
      _
    $region27: #{model_forward.1} parent=1 // pred_check_branch
      %38 = sbr.rel (0) target = $region29
    $region28: #{model_forward.1} parent=1 // pred_region
      %s40 = ssub.s32 3072, 3072
      %41 = vsyncadd [#allocation5], %s40
      %s42 = sshll.u32 [#allocation4], 4
      %s43 = int_to_ptr.vmem [resolvable:$true] %s42
      %48 = dma.hbm_to_vmem [thread:$0]  %s6, 3072, %s43, [#allocation5], 64, 64, 4
    $region29: #{model_forward.1} parent=1 // pred_fallthru
      _
    // Predicated region
    $region30: #{model_forward.1} parent=1 // pred_check
      _
    $region31: #{model_forward.1} parent=1 // pred_check_branch
      %50 = sbr.rel (0) target = $region33
    $region32: #{model_forward.1} parent=1 // pred_region
      _
    $region33: #{model_forward.1} parent=1 // pred_fallthru
      _
    // Predicated region
    $region34: #{model_forward.1} parent=1 // pred_check
      _
    $region35: #{model_forward.1} parent=1 // pred_check_branch
      %52 = sbr.rel (0) target = $region37
    $region36: #{model_forward.1} parent=1 // pred_region
      %53 = dma.done [#allocation3], 24576
    $region37: #{model_forward.1} parent=1 // pred_fallthru
      _
    // Predicated region
    $region38: #{model_forward.1} parent=1 // pred_check
      _
    $region39: #{model_forward.1} parent=1 // pred_check_branch
      %55 = sbr.rel (0) target = $region41
    $region40: #{model_forward.1} parent=1 // pred_region
      %56 = dma.done [#allocation5], 3072
    $region41: #{model_forward.1} parent=1 // pred_fallthru
      _
    %v58 = vld [vmem:[%s1] sm:$0xff]
    %v59 = vld [vmem:[%s1 + $0x8] sm:$0xff]
    %v60 = vld [vmem:[%s1 + $0x10] sm:$0xff]
    %v61 = vld [vmem:[%s1 + $0x18] sm:$0xff]
    %v62 = vld [vmem:[%s1 + $0x20] sm:$0xff]
    %v63 = vld [vmem:[%s1 + $0x28] sm:$0xff]
    %v64 = vld [vmem:[%s1 + $0x30] sm:$0xff]
    %v65 = vld [vmem:[%s1 + $0x38] sm:$0xff]
    %v66 = vunpack.c.l.bf16 %v58
    %v67 = vunpack.c.h.bf16 %v58
    %v68 = vunpack.c.l.bf16 %v59
    %v69 = vunpack.c.h.bf16 %v59
    %v70 = vunpack.c.l.bf16 %v60
    %v71 = vunpack.c.h.bf16 %v60
    %v72 = vunpack.c.l.bf16 %v61
    %v73 = vunpack.c.h.bf16 %v61
    %v74 = vunpack.c.l.bf16 %v62
    %v75 = vunpack.c.h.bf16 %v62
    %v76 = vunpack.c.l.bf16 %v63
    %v77 = vunpack.c.h.bf16 %v63
    %v78 = vunpack.c.l.bf16 %v64
    %v79 = vunpack.c.h.bf16 %v64
    %v80 = vunpack.c.l.bf16 %v65
    %v81 = vunpack.c.h.bf16 %v65
    %v82 = vld [vmem:[%s0] sm:$0xff]
    %v83 = vld [vmem:[%s0 + $0x8] sm:$0xff]
    %v84 = vld [vmem:[%s0 + $0x10] sm:$0xff]
    %v85 = vld [vmem:[%s0 + $0x18] sm:$0xff]
    %v86 = vld [vmem:[%s0 + $0x20] sm:$0xff]
    %v87 = vld [vmem:[%s0 + $0x28] sm:$0xff]
    %v88 = vld [vmem:[%s0 + $0x30] sm:$0xff]
    %v89 = vld [vmem:[%s0 + $0x38] sm:$0xff]
    %91 = vset.pattern.permute.xlu0 0
    %92 = vperm.xlu0 %91, %v82
    %v93 = vpop.permute.xlu0 %92
    %96 = vset.pattern.permute.xlu0 0
    %97 = vperm.xlu0 %96, %v83
    %v98 = vpop.permute.xlu0 %97
    %101 = vset.pattern.permute.xlu0 0
    %102 = vperm.xlu0 %101, %v84
    %v103 = vpop.permute.xlu0 %102
    %106 = vset.pattern.permute.xlu0 0
    %107 = vperm.xlu0 %106, %v85
    %v108 = vpop.permute.xlu0 %107
    %111 = vset.pattern.permute.xlu0 0
    %112 = vperm.xlu0 %111, %v86
    %v113 = vpop.permute.xlu0 %112
    %116 = vset.pattern.permute.xlu0 0
    %117 = vperm.xlu0 %116, %v87
    %v118 = vpop.permute.xlu0 %117
    %121 = vset.pattern.permute.xlu0 0
    %122 = vperm.xlu0 %121, %v88
    %v123 = vpop.permute.xlu0 %122
    %126 = vset.pattern.permute.xlu0 0
    %127 = vperm.xlu0 %126, %v89
    %v128 = vpop.permute.xlu0 %127
    %v130 = vmul.f32 %v66, %v93
    %v131 = vmul.f32 %v67, %v93
    %v132 = vmul.f32 %v68, %v98
    %v133 = vmul.f32 %v69, %v98
    %v134 = vmul.f32 %v70, %v103
    %v135 = vmul.f32 %v71, %v103
    %v136 = vmul.f32 %v72, %v108
    %v137 = vmul.f32 %v73, %v108
    %v138 = vmul.f32 %v74, %v113
    %v139 = vmul.f32 %v75, %v113
    %v140 = vmul.f32 %v76, %v118
    %v141 = vmul.f32 %v77, %v118
    %v142 = vmul.f32 %v78, %v123
    %v143 = vmul.f32 %v79, %v123
    %v144 = vmul.f32 %v80, %v128
    %v145 = vmul.f32 %v81, %v128
    %v146 = vrot.slane %v130, 4
    %v147 = vadd.f32 %v130, %v146
    %v148 = vrot.slane %v147, 2
    %v149 = vadd.f32 %v147, %v148
    %v150 = vrot.slane %v149, 1
    %v151 = vadd.f32 %v149, %v150
    %v152 = vrot.slane %v131, 4
    %v153 = vadd.f32 %v131, %v152
    %v154 = vrot.slane %v153, 2
    %v155 = vadd.f32 %v153, %v154
    %v156 = vrot.slane %v155, 1
    %v157 = vadd.f32 %v155, %v156
    %v158 = vrot.slane %v132, 4
    %v159 = vadd.f32 %v132, %v158
    %v160 = vrot.slane %v159, 2
    %v161 = vadd.f32 %v159, %v160
    %v162 = vrot.slane %v161, 1
    %v163 = vadd.f32 %v161, %v162
    %v164 = vrot.slane %v133, 4
    %v165 = vadd.f32 %v133, %v164
    %v166 = vrot.slane %v165, 2
    %v167 = vadd.f32 %v165, %v166
    %v168 = vrot.slane %v167, 1
    %v169 = vadd.f32 %v167, %v168
    %v170 = vrot.slane %v134, 4
    %v171 = vadd.f32 %v134, %v170
    %v172 = vrot.slane %v171, 2
    %v173 = vadd.f32 %v171, %v172
    %v174 = vrot.slane %v173, 1
    %v175 = vadd.f32 %v173, %v174
    %v176 = vrot.slane %v135, 4
    %v177 = vadd.f32 %v135, %v176
    %v178 = vrot.slane %v177, 2
    %v179 = vadd.f32 %v177, %v178
    %v180 = vrot.slane %v179, 1
    %v181 = vadd.f32 %v179, %v180
    %v182 = vrot.slane %v136, 4
    %v183 = vadd.f32 %v136, %v182
    %v184 = vrot.slane %v183, 2
    %v185 = vadd.f32 %v183, %v184
    %v186 = vrot.slane %v185, 1
    %v187 = vadd.f32 %v185, %v186
    %v188 = vrot.slane %v137, 4
    %v189 = vadd.f32 %v137, %v188
    %v190 = vrot.slane %v189, 2
    %v191 = vadd.f32 %v189, %v190
    %v192 = vrot.slane %v191, 1
    %v193 = vadd.f32 %v191, %v192
    %v194 = vrot.slane %v138, 4
    %v195 = vadd.f32 %v138, %v194
    %v196 = vrot.slane %v195, 2
    %v197 = vadd.f32 %v195, %v196
    %v198 = vrot.slane %v197, 1
    %v199 = vadd.f32 %v197, %v198
    %v200 = vrot.slane %v139, 4
    %v201 = vadd.f32 %v139, %v200
    %v202 = vrot.slane %v201, 2
    %v203 = vadd.f32 %v201, %v202
    %v204 = vrot.slane %v203, 1
    %v205 = vadd.f32 %v203, %v204
    %v206 = vrot.slane %v140, 4
    %v207 = vadd.f32 %v140, %v206
    %v208 = vrot.slane %v207, 2
    %v209 = vadd.f32 %v207, %v208
    %v210 = vrot.slane %v209, 1
    %v211 = vadd.f32 %v209, %v210
    %v212 = vrot.slane %v141, 4
    %v213 = vadd.f32 %v141, %v212
    %v214 = vrot.slane %v213, 2
    %v215 = vadd.f32 %v213, %v214
    %v216 = vrot.slane %v215, 1
    %v217 = vadd.f32 %v215, %v216
    %v218 = vrot.slane %v142, 4
    %v219 = vadd.f32 %v142, %v218
    %v220 = vrot.slane %v219, 2
    %v221 = vadd.f32 %v219, %v220
    %v222 = vrot.slane %v221, 1
    %v223 = vadd.f32 %v221, %v222
    %v224 = vrot.slane %v143, 4
    %v225 = vadd.f32 %v143, %v224
    %v226 = vrot.slane %v225, 2
    %v227 = vadd.f32 %v225, %v226
    %v228 = vrot.slane %v227, 1
    %v229 = vadd.f32 %v227, %v228
    %v230 = vrot.slane %v144, 4
    %v231 = vadd.f32 %v144, %v230
    %v232 = vrot.slane %v231, 2
    %v233 = vadd.f32 %v231, %v232
    %v234 = vrot.slane %v233, 1
    %v235 = vadd.f32 %v233, %v234
    %v236 = vrot.slane %v145, 4
    %v237 = vadd.f32 %v145, %v236
    %v238 = vrot.slane %v237, 2
    %v239 = vadd.f32 %v237, %v238
    %v240 = vrot.slane %v239, 1
    %v241 = vadd.f32 %v239, %v240
    %v242 = vpack.c.bf16 %v151, %v151
    %v243 = vpack.c.bf16 %v157, %v157
    %v244 = vpack.c.bf16 %v163, %v163
    %v245 = vpack.c.bf16 %v169, %v169
    %v246 = vpack.c.bf16 %v175, %v175
    %v247 = vpack.c.bf16 %v181, %v181
    %v248 = vpack.c.bf16 %v187, %v187
    %v249 = vpack.c.bf16 %v193, %v193
    %v250 = vpack.c.bf16 %v199, %v199
    %v251 = vpack.c.bf16 %v205, %v205
    %v252 = vpack.c.bf16 %v211, %v211
    %v253 = vpack.c.bf16 %v217, %v217
    %v254 = vpack.c.bf16 %v223, %v223
    %v255 = vpack.c.bf16 %v229, %v229
    %v256 = vpack.c.bf16 %v235, %v235
    %v257 = vpack.c.bf16 %v241, %v241
    %v258 = vld [vmem:[#allocation2] sm:$0xff]
    %v259 = vld [vmem:[#allocation2 + $0x8] sm:$0xff]
    %v260 = vld [vmem:[#allocation2 + $0x10] sm:$0xff]
    %v261 = vld [vmem:[#allocation2 + $0x18] sm:$0xff]
    %v262 = vld [vmem:[#allocation2 + $0x20] sm:$0xff]
    %v263 = vld [vmem:[#allocation2 + $0x28] sm:$0xff]
    %v264 = vld [vmem:[#allocation2 + $0x30] sm:$0xff]
    %v265 = vld [vmem:[#allocation2 + $0x38] sm:$0xff]
    %v266 = vld [vmem:[#allocation2 + $0x40] sm:$0xff]
    %v267 = vld [vmem:[#allocation2 + $0x48] sm:$0xff]
    %v268 = vld [vmem:[#allocation2 + $0x50] sm:$0xff]
    %v269 = vld [vmem:[#allocation2 + $0x58] sm:$0xff]
    %v270 = vld [vmem:[#allocation2 + $0x60] sm:$0xff]
    %v271 = vld [vmem:[#allocation2 + $0x68] sm:$0xff]
    %v272 = vld [vmem:[#allocation2 + $0x70] sm:$0xff]
    %v273 = vld [vmem:[#allocation2 + $0x78] sm:$0xff]
    %v274 = vld [vmem:[#allocation2 + $0x80] sm:$0xff]
    %v275 = vld [vmem:[#allocation2 + $0x88] sm:$0xff]
    %v276 = vld [vmem:[#allocation2 + $0x90] sm:$0xff]
    %v277 = vld [vmem:[#allocation2 + $0x98] sm:$0xff]
    %v278 = vld [vmem:[#allocation2 + $0xa0] sm:$0xff]
    %v279 = vld [vmem:[#allocation2 + $0xa8] sm:$0xff]
    %v280 = vld [vmem:[#allocation2 + $0xb0] sm:$0xff]
    %v281 = vld [vmem:[#allocation2 + $0xb8] sm:$0xff]
    %v282 = vld [vmem:[#allocation2 + $0xc0] sm:$0xff]
    %v283 = vld [vmem:[#allocation2 + $0xc8] sm:$0xff]
    %v284 = vld [vmem:[#allocation2 + $0xd0] sm:$0xff]
    %v285 = vld [vmem:[#allocation2 + $0xd8] sm:$0xff]
    %v286 = vld [vmem:[#allocation2 + $0xe0] sm:$0xff]
    %v287 = vld [vmem:[#allocation2 + $0xe8] sm:$0xff]
    %v288 = vld [vmem:[#allocation2 + $0xf0] sm:$0xff]
    %v289 = vld [vmem:[#allocation2 + $0xf8] sm:$0xff]
    %v290 = vld [vmem:[#allocation2 + $0x100] sm:$0xff]
    %v291 = vld [vmem:[#allocation2 + $0x108] sm:$0xff]
    %v292 = vld [vmem:[#allocation2 + $0x110] sm:$0xff]
    %v293 = vld [vmem:[#allocation2 + $0x118] sm:$0xff]
    %v294 = vld [vmem:[#allocation2 + $0x120] sm:$0xff]
    %v295 = vld [vmem:[#allocation2 + $0x128] sm:$0xff]
    %v296 = vld [vmem:[#allocation2 + $0x130] sm:$0xff]
    %v297 = vld [vmem:[#allocation2 + $0x138] sm:$0xff]
    %v298 = vld [vmem:[#allocation2 + $0x140] sm:$0xff]
    %v299 = vld [vmem:[#allocation2 + $0x148] sm:$0xff]
    %v300 = vld [vmem:[#allocation2 + $0x150] sm:$0xff]
    %v301 = vld [vmem:[#allocation2 + $0x158] sm:$0xff]
    %v302 = vld [vmem:[#allocation2 + $0x160] sm:$0xff]
    %v303 = vld [vmem:[#allocation2 + $0x168] sm:$0xff]
    %v304 = vld [vmem:[#allocation2 + $0x170] sm:$0xff]
    %v305 = vld [vmem:[#allocation2 + $0x178] sm:$0xff]
    %v306 = vld [vmem:[#allocation2 + $0x180] sm:$0xff]
    %v307 = vld [vmem:[#allocation2 + $0x188] sm:$0xff]
    %v308 = vld [vmem:[#allocation2 + $0x190] sm:$0xff]
    %v309 = vld [vmem:[#allocation2 + $0x198] sm:$0xff]
    %v310 = vld [vmem:[#allocation2 + $0x1a0] sm:$0xff]
    %v311 = vld [vmem:[#allocation2 + $0x1a8] sm:$0xff]
    %v312 = vld [vmem:[#allocation2 + $0x1b0] sm:$0xff]
    %v313 = vld [vmem:[#allocation2 + $0x1b8] sm:$0xff]
    %v314 = vld [vmem:[#allocation2 + $0x1c0] sm:$0xff]
    %v315 = vld [vmem:[#allocation2 + $0x1c8] sm:$0xff]
    %v316 = vld [vmem:[#allocation2 + $0x1d0] sm:$0xff]
    %v317 = vld [vmem:[#allocation2 + $0x1d8] sm:$0xff]
    %v318 = vld [vmem:[#allocation2 + $0x1e0] sm:$0xff]
    %v319 = vld [vmem:[#allocation2 + $0x1e8] sm:$0xff]
    %v320 = vld [vmem:[#allocation2 + $0x1f0] sm:$0xff]
    %v321 = vld [vmem:[#allocation2 + $0x1f8] sm:$0xff]
    %v322 = vld [vmem:[#allocation2 + $0x200] sm:$0xff]
    %v323 = vld [vmem:[#allocation2 + $0x208] sm:$0xff]
    %v324 = vld [vmem:[#allocation2 + $0x210] sm:$0xff]
    %v325 = vld [vmem:[#allocation2 + $0x218] sm:$0xff]
    %v326 = vld [vmem:[#allocation2 + $0x220] sm:$0xff]
    %v327 = vld [vmem:[#allocation2 + $0x228] sm:$0xff]
    %v328 = vld [vmem:[#allocation2 + $0x230] sm:$0xff]
    %v329 = vld [vmem:[#allocation2 + $0x238] sm:$0xff]
    %v330 = vld [vmem:[#allocation2 + $0x240] sm:$0xff]
    %v331 = vld [vmem:[#allocation2 + $0x248] sm:$0xff]
    %v332 = vld [vmem:[#allocation2 + $0x250] sm:$0xff]
    %v333 = vld [vmem:[#allocation2 + $0x258] sm:$0xff]
    %v334 = vld [vmem:[#allocation2 + $0x260] sm:$0xff]
    %v335 = vld [vmem:[#allocation2 + $0x268] sm:$0xff]
    %v336 = vld [vmem:[#allocation2 + $0x270] sm:$0xff]
    %v337 = vld [vmem:[#allocation2 + $0x278] sm:$0xff]
    %v338 = vld [vmem:[#allocation2 + $0x280] sm:$0xff]
    %v339 = vld [vmem:[#allocation2 + $0x288] sm:$0xff]
    %v340 = vld [vmem:[#allocation2 + $0x290] sm:$0xff]
    %v341 = vld [vmem:[#allocation2 + $0x298] sm:$0xff]
    %v342 = vld [vmem:[#allocation2 + $0x2a0] sm:$0xff]
    %v343 = vld [vmem:[#allocation2 + $0x2a8] sm:$0xff]
    %v344 = vld [vmem:[#allocation2 + $0x2b0] sm:$0xff]
    %v345 = vld [vmem:[#allocation2 + $0x2b8] sm:$0xff]
    %v346 = vld [vmem:[#allocation2 + $0x2c0] sm:$0xff]
    %v347 = vld [vmem:[#allocation2 + $0x2c8] sm:$0xff]
    %v348 = vld [vmem:[#allocation2 + $0x2d0] sm:$0xff]
    %v349 = vld [vmem:[#allocation2 + $0x2d8] sm:$0xff]
    %v350 = vld [vmem:[#allocation2 + $0x2e0] sm:$0xff]
    %v351 = vld [vmem:[#allocation2 + $0x2e8] sm:$0xff]
    %v352 = vld [vmem:[#allocation2 + $0x2f0] sm:$0xff]
    %v353 = vld [vmem:[#allocation2 + $0x2f8] sm:$0xff]
    %v354 = vld [vmem:[#allocation2 + $0x300] sm:$0xff]
    %v355 = vld [vmem:[#allocation2 + $0x308] sm:$0xff]
    %v356 = vld [vmem:[#allocation2 + $0x310] sm:$0xff]
    %v357 = vld [vmem:[#allocation2 + $0x318] sm:$0xff]
    %v358 = vld [vmem:[#allocation2 + $0x320] sm:$0xff]
    %v359 = vld [vmem:[#allocation2 + $0x328] sm:$0xff]
    %v360 = vld [vmem:[#allocation2 + $0x330] sm:$0xff]
    %v361 = vld [vmem:[#allocation2 + $0x338] sm:$0xff]
    %v362 = vld [vmem:[#allocation2 + $0x340] sm:$0xff]
    %v363 = vld [vmem:[#allocation2 + $0x348] sm:$0xff]
    %v364 = vld [vmem:[#allocation2 + $0x350] sm:$0xff]
    %v365 = vld [vmem:[#allocation2 + $0x358] sm:$0xff]
    %v366 = vld [vmem:[#allocation2 + $0x360] sm:$0xff]
    %v367 = vld [vmem:[#allocation2 + $0x368] sm:$0xff]
    %v368 = vld [vmem:[#allocation2 + $0x370] sm:$0xff]
    %v369 = vld [vmem:[#allocation2 + $0x378] sm:$0xff]
    %v370 = vld [vmem:[#allocation2 + $0x380] sm:$0xff]
    %v371 = vld [vmem:[#allocation2 + $0x388] sm:$0xff]
    %v372 = vld [vmem:[#allocation2 + $0x390] sm:$0xff]
    %v373 = vld [vmem:[#allocation2 + $0x398] sm:$0xff]
    %v374 = vld [vmem:[#allocation2 + $0x3a0] sm:$0xff]
    %v375 = vld [vmem:[#allocation2 + $0x3a8] sm:$0xff]
    %v376 = vld [vmem:[#allocation2 + $0x3b0] sm:$0xff]
    %v377 = vld [vmem:[#allocation2 + $0x3b8] sm:$0xff]
    %v378 = vld [vmem:[#allocation2 + $0x3c0] sm:$0xff]
    %v379 = vld [vmem:[#allocation2 + $0x3c8] sm:$0xff]
    %v380 = vld [vmem:[#allocation2 + $0x3d0] sm:$0xff]
    %v381 = vld [vmem:[#allocation2 + $0x3d8] sm:$0xff]
    %v382 = vld [vmem:[#allocation2 + $0x3e0] sm:$0xff]
    %v383 = vld [vmem:[#allocation2 + $0x3e8] sm:$0xff]
    %v384 = vld [vmem:[#allocation2 + $0x3f0] sm:$0xff]
    %v385 = vld [vmem:[#allocation2 + $0x3f8] sm:$0xff]
    %v386 = vld [vmem:[#allocation2 + $0x400] sm:$0xff]
    %v387 = vld [vmem:[#allocation2 + $0x408] sm:$0xff]
    %v388 = vld [vmem:[#allocation2 + $0x410] sm:$0xff]
    %v389 = vld [vmem:[#allocation2 + $0x418] sm:$0xff]
    %v390 = vld [vmem:[#allocation2 + $0x420] sm:$0xff]
    %v391 = vld [vmem:[#allocation2 + $0x428] sm:$0xff]
    %v392 = vld [vmem:[#allocation2 + $0x430] sm:$0xff]
    %v393 = vld [vmem:[#allocation2 + $0x438] sm:$0xff]
    %v394 = vld [vmem:[#allocation2 + $0x440] sm:$0xff]
    %v395 = vld [vmem:[#allocation2 + $0x448] sm:$0xff]
    %v396 = vld [vmem:[#allocation2 + $0x450] sm:$0xff]
    %v397 = vld [vmem:[#allocation2 + $0x458] sm:$0xff]
    %v398 = vld [vmem:[#allocation2 + $0x460] sm:$0xff]
    %v399 = vld [vmem:[#allocation2 + $0x468] sm:$0xff]
    %v400 = vld [vmem:[#allocation2 + $0x470] sm:$0xff]
    %v401 = vld [vmem:[#allocation2 + $0x478] sm:$0xff]
    %v402 = vld [vmem:[#allocation2 + $0x480] sm:$0xff]
    %v403 = vld [vmem:[#allocation2 + $0x488] sm:$0xff]
    %v404 = vld [vmem:[#allocation2 + $0x490] sm:$0xff]
    %v405 = vld [vmem:[#allocation2 + $0x498] sm:$0xff]
    %v406 = vld [vmem:[#allocation2 + $0x4a0] sm:$0xff]
    %v407 = vld [vmem:[#allocation2 + $0x4a8] sm:$0xff]
    %v408 = vld [vmem:[#allocation2 + $0x4b0] sm:$0xff]
    %v409 = vld [vmem:[#allocation2 + $0x4b8] sm:$0xff]
    %v410 = vld [vmem:[#allocation2 + $0x4c0] sm:$0xff]
    %v411 = vld [vmem:[#allocation2 + $0x4c8] sm:$0xff]
    %v412 = vld [vmem:[#allocation2 + $0x4d0] sm:$0xff]
    %v413 = vld [vmem:[#allocation2 + $0x4d8] sm:$0xff]
    %v414 = vld [vmem:[#allocation2 + $0x4e0] sm:$0xff]
    %v415 = vld [vmem:[#allocation2 + $0x4e8] sm:$0xff]
    %v416 = vld [vmem:[#allocation2 + $0x4f0] sm:$0xff]
    %v417 = vld [vmem:[#allocation2 + $0x4f8] sm:$0xff]
    %v418 = vld [vmem:[#allocation2 + $0x500] sm:$0xff]
    %v419 = vld [vmem:[#allocation2 + $0x508] sm:$0xff]
    %v420 = vld [vmem:[#allocation2 + $0x510] sm:$0xff]
    %v421 = vld [vmem:[#allocation2 + $0x518] sm:$0xff]
    %v422 = vld [vmem:[#allocation2 + $0x520] sm:$0xff]
    %v423 = vld [vmem:[#allocation2 + $0x528] sm:$0xff]
    %v424 = vld [vmem:[#allocation2 + $0x530] sm:$0xff]
    %v425 = vld [vmem:[#allocation2 + $0x538] sm:$0xff]
    %v426 = vld [vmem:[#allocation2 + $0x540] sm:$0xff]
    %v427 = vld [vmem:[#allocation2 + $0x548] sm:$0xff]
    %v428 = vld [vmem:[#allocation2 + $0x550] sm:$0xff]
    %v429 = vld [vmem:[#allocation2 + $0x558] sm:$0xff]
    %v430 = vld [vmem:[#allocation2 + $0x560] sm:$0xff]
    %v431 = vld [vmem:[#allocation2 + $0x568] sm:$0xff]
    %v432 = vld [vmem:[#allocation2 + $0x570] sm:$0xff]
    %v433 = vld [vmem:[#allocation2 + $0x578] sm:$0xff]
    %v434 = vld [vmem:[#allocation2 + $0x580] sm:$0xff]
    %v435 = vld [vmem:[#allocation2 + $0x588] sm:$0xff]
    %v436 = vld [vmem:[#allocation2 + $0x590] sm:$0xff]
    %v437 = vld [vmem:[#allocation2 + $0x598] sm:$0xff]
    %v438 = vld [vmem:[#allocation2 + $0x5a0] sm:$0xff]
    %v439 = vld [vmem:[#allocation2 + $0x5a8] sm:$0xff]
    %v440 = vld [vmem:[#allocation2 + $0x5b0] sm:$0xff]
    %v441 = vld [vmem:[#allocation2 + $0x5b8] sm:$0xff]
    %v442 = vld [vmem:[#allocation2 + $0x5c0] sm:$0xff]
    %v443 = vld [vmem:[#allocation2 + $0x5c8] sm:$0xff]
    %v444 = vld [vmem:[#allocation2 + $0x5d0] sm:$0xff]
    %v445 = vld [vmem:[#allocation2 + $0x5d8] sm:$0xff]
    %v446 = vld [vmem:[#allocation2 + $0x5e0] sm:$0xff]
    %v447 = vld [vmem:[#allocation2 + $0x5e8] sm:$0xff]
    %v448 = vld [vmem:[#allocation2 + $0x5f0] sm:$0xff]
    %v449 = vld [vmem:[#allocation2 + $0x5f8] sm:$0xff]
    %v450 = vld [vmem:[%s3] sm:$0xff]
    %v451 = vld [vmem:[%s3 + $0x8] sm:$0xf]
    %v454 = vlaneseq
    %v455 = vshrl.u32 %v454, 7
    %v456 = vsub.s32 0, %v455
    %v457 = vrot.slane %v450, %v456
    %v458 = vlaneseq
    %v459 = vshrl.u32 %v458, 7
    %v460 = vsub.s32 1, %v459
    %v461 = vrot.slane %v450, %v460
    %v462 = vlaneseq
    %v463 = vshrl.u32 %v462, 7
    %v464 = vsub.s32 2, %v463
    %v465 = vrot.slane %v450, %v464
    %v466 = vlaneseq
    %v467 = vshrl.u32 %v466, 7
    %v468 = vsub.s32 3, %v467
    %v469 = vrot.slane %v450, %v468
    %v470 = vlaneseq
    %v471 = vshrl.u32 %v470, 7
    %v472 = vsub.s32 4, %v471
    %v473 = vrot.slane %v450, %v472
    %v474 = vlaneseq
    %v475 = vshrl.u32 %v474, 7
    %v476 = vsub.s32 5, %v475
    %v477 = vrot.slane %v450, %v476
    %v478 = vlaneseq
    %v479 = vshrl.u32 %v478, 7
    %v480 = vsub.s32 6, %v479
    %v481 = vrot.slane %v450, %v480
    %v482 = vlaneseq
    %v483 = vshrl.u32 %v482, 7
    %v484 = vsub.s32 7, %v483
    %v485 = vrot.slane %v450, %v484
    %v486 = vlaneseq
    %v487 = vshrl.u32 %v486, 7
    %v488 = vsub.s32 0, %v487
    %v489 = vrot.slane %v451, %v488
    %v490 = vlaneseq
    %v491 = vshrl.u32 %v490, 7
    %v492 = vsub.s32 1, %v491
    %v493 = vrot.slane %v451, %v492
    %v494 = vlaneseq
    %v495 = vshrl.u32 %v494, 7
    %v496 = vsub.s32 2, %v495
    %v497 = vrot.slane %v451, %v496
    %v498 = vlaneseq
    %v499 = vshrl.u32 %v498, 7
    %v500 = vsub.s32 3, %v499
    %v501 = vrot.slane %v451, %v500
    %v530 = vunpack.c.l.b16 %v242
    %v531 = vunpack.c.l.b16 %v243
    %v532 = vunpack.c.l.b16 %v244
    %v533 = vunpack.c.l.b16 %v245
    %v534 = vunpack.c.l.b16 %v246
    %v535 = vunpack.c.l.b16 %v247
    %v536 = vunpack.c.l.b16 %v248
    %v537 = vunpack.c.l.b16 %v249
    %v538 = vunpack.c.l.b16 %v250
    %v539 = vunpack.c.l.b16 %v251
    %v540 = vunpack.c.l.b16 %v252
    %v541 = vunpack.c.l.b16 %v253
    %v542 = vunpack.c.l.b16 %v254
    %v543 = vunpack.c.l.b16 %v255
    %v544 = vunpack.c.l.b16 %v256
    %v545 = vunpack.c.l.b16 %v257
    %vm546 = vcmask 1041409
    %v547 = vsel %vm546, %v532, %v530
    %vm548 = vcmask 1042434
    %v549 = vsel %vm548, %v534, %v547
    %vm550 = vcmask 1043459
    %v551 = vsel %vm550, %v536, %v549
    %vm552 = vcmask 1044484
    %v553 = vsel %vm552, %v538, %v551
    %vm554 = vcmask 1045509
    %v555 = vsel %vm554, %v540, %v553
    %vm556 = vcmask 1046534
    %v557 = vsel %vm556, %v542, %v555
    %vm558 = vcmask 1047559
    %v559 = vsel %vm558, %v544, %v557
    %v560 = vsel %vm546, %v533, %v531
    %v561 = vsel %vm548, %v535, %v560
    %v562 = vsel %vm550, %v537, %v561
    %v563 = vsel %vm552, %v539, %v562
    %v564 = vsel %vm554, %v541, %v563
    %v565 = vsel %vm556, %v543, %v564
    %v566 = vsel %vm558, %v545, %v565
    %v567 = vpack.c.b16 %v559, %v559
    %v568 = vpack.c.b16 %v566, %v566
    %v763 = vunpack.c.l.b16 %v258
    %v764 = vunpack.c.h.b16 %v258
    %v765 = vunpack.c.l.b16 %v259
    %v766 = vunpack.c.h.b16 %v259
    %v767 = vunpack.c.l.b16 %v260
    %v768 = vunpack.c.h.b16 %v260
    %v769 = vunpack.c.l.b16 %v261
    %v770 = vunpack.c.h.b16 %v261
    %v771 = vunpack.c.l.b16 %v262
    %v772 = vunpack.c.h.b16 %v262
    %v773 = vunpack.c.l.b16 %v263
    %v774 = vunpack.c.h.b16 %v263
    %v775 = vunpack.c.l.b16 %v264
    %v776 = vunpack.c.h.b16 %v264
    %v777 = vunpack.c.l.b16 %v265
    %v778 = vunpack.c.h.b16 %v265
    %v779 = vunpack.c.l.b16 %v266
    %v780 = vunpack.c.h.b16 %v266
    %v781 = vunpack.c.l.b16 %v267
    %v782 = vunpack.c.h.b16 %v267
    %v783 = vunpack.c.l.b16 %v268
    %v784 = vunpack.c.h.b16 %v268
    %v785 = vunpack.c.l.b16 %v269
    %v786 = vunpack.c.h.b16 %v269
    %v787 = vunpack.c.l.b16 %v270
    %v788 = vunpack.c.h.b16 %v270
    %v789 = vunpack.c.l.b16 %v271
    %v790 = vunpack.c.h.b16 %v271
    %v791 = vunpack.c.l.b16 %v272
    %v792 = vunpack.c.h.b16 %v272
    %v793 = vunpack.c.l.b16 %v273
    %v794 = vunpack.c.h.b16 %v273
    %v795 = vunpack.c.l.b16 %v274
    %v796 = vunpack.c.h.b16 %v274
    %v797 = vunpack.c.l.b16 %v275
    %v798 = vunpack.c.h.b16 %v275
    %v799 = vunpack.c.l.b16 %v276
    %v800 = vunpack.c.h.b16 %v276
    %v801 = vunpack.c.l.b16 %v277
    %v802 = vunpack.c.h.b16 %v277
    %v803 = vunpack.c.l.b16 %v278
    %v804 = vunpack.c.h.b16 %v278
    %v805 = vunpack.c.l.b16 %v279
    %v806 = vunpack.c.h.b16 %v279
    %v807 = vunpack.c.l.b16 %v280
    %v808 = vunpack.c.h.b16 %v280
    %v809 = vunpack.c.l.b16 %v281
    %v810 = vunpack.c.h.b16 %v281
    %v811 = vunpack.c.l.b16 %v282
    %v812 = vunpack.c.h.b16 %v282
    %v813 = vunpack.c.l.b16 %v283
    %v814 = vunpack.c.h.b16 %v283
    %v815 = vunpack.c.l.b16 %v284
    %v816 = vunpack.c.h.b16 %v284
    %v817 = vunpack.c.l.b16 %v285
    %v818 = vunpack.c.h.b16 %v285
    %v819 = vunpack.c.l.b16 %v286
    %v820 = vunpack.c.h.b16 %v286
    %v821 = vunpack.c.l.b16 %v287
    %v822 = vunpack.c.h.b16 %v287
    %v823 = vunpack.c.l.b16 %v288
    %v824 = vunpack.c.h.b16 %v288
    %v825 = vunpack.c.l.b16 %v289
    %v826 = vunpack.c.h.b16 %v289
    %v827 = vunpack.c.l.b16 %v290
    %v828 = vunpack.c.h.b16 %v290
    %v829 = vunpack.c.l.b16 %v291
    %v830 = vunpack.c.h.b16 %v291
    %v831 = vunpack.c.l.b16 %v292
    %v832 = vunpack.c.h.b16 %v292
    %v833 = vunpack.c.l.b16 %v293
    %v834 = vunpack.c.h.b16 %v293
    %v835 = vunpack.c.l.b16 %v294
    %v836 = vunpack.c.h.b16 %v294
    %v837 = vunpack.c.l.b16 %v295
    %v838 = vunpack.c.h.b16 %v295
    %v839 = vunpack.c.l.b16 %v296
    %v840 = vunpack.c.h.b16 %v296
    %v841 = vunpack.c.l.b16 %v297
    %v842 = vunpack.c.h.b16 %v297
    %v843 = vunpack.c.l.b16 %v298
    %v844 = vunpack.c.h.b16 %v298
    %v845 = vunpack.c.l.b16 %v299
    %v846 = vunpack.c.h.b16 %v299
    %v847 = vunpack.c.l.b16 %v300
    %v848 = vunpack.c.h.b16 %v300
    %v849 = vunpack.c.l.b16 %v301
    %v850 = vunpack.c.h.b16 %v301
    %v851 = vunpack.c.l.b16 %v302
    %v852 = vunpack.c.h.b16 %v302
    %v853 = vunpack.c.l.b16 %v303
    %v854 = vunpack.c.h.b16 %v303
    %v855 = vunpack.c.l.b16 %v304
    %v856 = vunpack.c.h.b16 %v304
    %v857 = vunpack.c.l.b16 %v305
    %v858 = vunpack.c.h.b16 %v305
    %v859 = vunpack.c.l.b16 %v306
    %v860 = vunpack.c.h.b16 %v306
    %v861 = vunpack.c.l.b16 %v307
    %v862 = vunpack.c.h.b16 %v307
    %v863 = vunpack.c.l.b16 %v308
    %v864 = vunpack.c.h.b16 %v308
    %v865 = vunpack.c.l.b16 %v309
    %v866 = vunpack.c.h.b16 %v309
    %v867 = vunpack.c.l.b16 %v310
    %v868 = vunpack.c.h.b16 %v310
    %v869 = vunpack.c.l.b16 %v311
    %v870 = vunpack.c.h.b16 %v311
    %v871 = vunpack.c.l.b16 %v312
    %v872 = vunpack.c.h.b16 %v312
    %v873 = vunpack.c.l.b16 %v313
    %v874 = vunpack.c.h.b16 %v313
    %v875 = vunpack.c.l.b16 %v314
    %v876 = vunpack.c.h.b16 %v314
    %v877 = vunpack.c.l.b16 %v315
    %v878 = vunpack.c.h.b16 %v315
    %v879 = vunpack.c.l.b16 %v316
    %v880 = vunpack.c.h.b16 %v316
    %v881 = vunpack.c.l.b16 %v317
    %v882 = vunpack.c.h.b16 %v317
    %v883 = vunpack.c.l.b16 %v318
    %v884 = vunpack.c.h.b16 %v318
    %v885 = vunpack.c.l.b16 %v319
    %v886 = vunpack.c.h.b16 %v319
    %v887 = vunpack.c.l.b16 %v320
    %v888 = vunpack.c.h.b16 %v320
    %v889 = vunpack.c.l.b16 %v321
    %v890 = vunpack.c.h.b16 %v321
    %v891 = vunpack.c.l.b16 %v322
    %v892 = vunpack.c.h.b16 %v322
    %v893 = vunpack.c.l.b16 %v323
    %v894 = vunpack.c.h.b16 %v323
    %v895 = vunpack.c.l.b16 %v324
    %v896 = vunpack.c.h.b16 %v324
    %v897 = vunpack.c.l.b16 %v325
    %v898 = vunpack.c.h.b16 %v325
    %v899 = vunpack.c.l.b16 %v326
    %v900 = vunpack.c.h.b16 %v326
    %v901 = vunpack.c.l.b16 %v327
    %v902 = vunpack.c.h.b16 %v327
    %v903 = vunpack.c.l.b16 %v328
    %v904 = vunpack.c.h.b16 %v328
    %v905 = vunpack.c.l.b16 %v329
    %v906 = vunpack.c.h.b16 %v329
    %v907 = vunpack.c.l.b16 %v330
    %v908 = vunpack.c.h.b16 %v330
    %v909 = vunpack.c.l.b16 %v331
    %v910 = vunpack.c.h.b16 %v331
    %v911 = vunpack.c.l.b16 %v332
    %v912 = vunpack.c.h.b16 %v332
    %v913 = vunpack.c.l.b16 %v333
    %v914 = vunpack.c.h.b16 %v333
    %v915 = vunpack.c.l.b16 %v334
    %v916 = vunpack.c.h.b16 %v334
    %v917 = vunpack.c.l.b16 %v335
    %v918 = vunpack.c.h.b16 %v335
    %v919 = vunpack.c.l.b16 %v336
    %v920 = vunpack.c.h.b16 %v336
    %v921 = vunpack.c.l.b16 %v337
    %v922 = vunpack.c.h.b16 %v337
    %v923 = vunpack.c.l.b16 %v338
    %v924 = vunpack.c.h.b16 %v338
    %v925 = vunpack.c.l.b16 %v339
    %v926 = vunpack.c.h.b16 %v339
    %v927 = vunpack.c.l.b16 %v340
    %v928 = vunpack.c.h.b16 %v340
    %v929 = vunpack.c.l.b16 %v341
    %v930 = vunpack.c.h.b16 %v341
    %v931 = vunpack.c.l.b16 %v342
    %v932 = vunpack.c.h.b16 %v342
    %v933 = vunpack.c.l.b16 %v343
    %v934 = vunpack.c.h.b16 %v343
    %v935 = vunpack.c.l.b16 %v344
    %v936 = vunpack.c.h.b16 %v344
    %v937 = vunpack.c.l.b16 %v345
    %v938 = vunpack.c.h.b16 %v345
    %v939 = vunpack.c.l.b16 %v346
    %v940 = vunpack.c.h.b16 %v346
    %v941 = vunpack.c.l.b16 %v347
    %v942 = vunpack.c.h.b16 %v347
    %v943 = vunpack.c.l.b16 %v348
    %v944 = vunpack.c.h.b16 %v348
    %v945 = vunpack.c.l.b16 %v349
    %v946 = vunpack.c.h.b16 %v349
    %v947 = vunpack.c.l.b16 %v350
    %v948 = vunpack.c.h.b16 %v350
    %v949 = vunpack.c.l.b16 %v351
    %v950 = vunpack.c.h.b16 %v351
    %v951 = vunpack.c.l.b16 %v352
    %v952 = vunpack.c.h.b16 %v352
    %v953 = vunpack.c.l.b16 %v353
    %v954 = vunpack.c.h.b16 %v353
    %v955 = vunpack.c.l.b16 %v354
    %v956 = vunpack.c.h.b16 %v354
    %v957 = vunpack.c.l.b16 %v355
    %v958 = vunpack.c.h.b16 %v355
    %v959 = vunpack.c.l.b16 %v356
    %v960 = vunpack.c.h.b16 %v356
    %v961 = vunpack.c.l.b16 %v357
    %v962 = vunpack.c.h.b16 %v357
    %v963 = vunpack.c.l.b16 %v358
    %v964 = vunpack.c.h.b16 %v358
    %v965 = vunpack.c.l.b16 %v359
    %v966 = vunpack.c.h.b16 %v359
    %v967 = vunpack.c.l.b16 %v360
    %v968 = vunpack.c.h.b16 %v360
    %v969 = vunpack.c.l.b16 %v361
    %v970 = vunpack.c.h.b16 %v361
    %v971 = vunpack.c.l.b16 %v362
    %v972 = vunpack.c.h.b16 %v362
    %v973 = vunpack.c.l.b16 %v363
    %v974 = vunpack.c.h.b16 %v363
    %v975 = vunpack.c.l.b16 %v364
    %v976 = vunpack.c.h.b16 %v364
    %v977 = vunpack.c.l.b16 %v365
    %v978 = vunpack.c.h.b16 %v365
    %v979 = vunpack.c.l.b16 %v366
    %v980 = vunpack.c.h.b16 %v366
    %v981 = vunpack.c.l.b16 %v367
    %v982 = vunpack.c.h.b16 %v367
    %v983 = vunpack.c.l.b16 %v368
    %v984 = vunpack.c.h.b16 %v368
    %v985 = vunpack.c.l.b16 %v369
    %v986 = vunpack.c.h.b16 %v369
    %v987 = vunpack.c.l.b16 %v370
    %v988 = vunpack.c.h.b16 %v370
    %v989 = vunpack.c.l.b16 %v371
    %v990 = vunpack.c.h.b16 %v371
    %v991 = vunpack.c.l.b16 %v372
    %v992 = vunpack.c.h.b16 %v372
    %v993 = vunpack.c.l.b16 %v373
    %v994 = vunpack.c.h.b16 %v373
    %v995 = vunpack.c.l.b16 %v374
    %v996 = vunpack.c.h.b16 %v374
    %v997 = vunpack.c.l.b16 %v375
    %v998 = vunpack.c.h.b16 %v375
    %v999 = vunpack.c.l.b16 %v376
    %v1000 = vunpack.c.h.b16 %v376
    %v1001 = vunpack.c.l.b16 %v377
    %v1002 = vunpack.c.h.b16 %v377
    %v1003 = vunpack.c.l.b16 %v378
    %v1004 = vunpack.c.h.b16 %v378
    %v1005 = vunpack.c.l.b16 %v379
    %v1006 = vunpack.c.h.b16 %v379
    %v1007 = vunpack.c.l.b16 %v380
    %v1008 = vunpack.c.h.b16 %v380
    %v1009 = vunpack.c.l.b16 %v381
    %v1010 = vunpack.c.h.b16 %v381
    %v1011 = vunpack.c.l.b16 %v382
    %v1012 = vunpack.c.h.b16 %v382
    %v1013 = vunpack.c.l.b16 %v383
    %v1014 = vunpack.c.h.b16 %v383
    %v1015 = vunpack.c.l.b16 %v384
    %v1016 = vunpack.c.h.b16 %v384
    %v1017 = vunpack.c.l.b16 %v385
    %v1018 = vunpack.c.h.b16 %v385
    %v1019 = vunpack.c.l.b16 %v386
    %v1020 = vunpack.c.h.b16 %v386
    %v1021 = vunpack.c.l.b16 %v387
    %v1022 = vunpack.c.h.b16 %v387
    %v1023 = vunpack.c.l.b16 %v388
    %v1024 = vunpack.c.h.b16 %v388
    %v1025 = vunpack.c.l.b16 %v389
    %v1026 = vunpack.c.h.b16 %v389
    %v1027 = vunpack.c.l.b16 %v390
    %v1028 = vunpack.c.h.b16 %v390
    %v1029 = vunpack.c.l.b16 %v391
    %v1030 = vunpack.c.h.b16 %v391
    %v1031 = vunpack.c.l.b16 %v392
    %v1032 = vunpack.c.h.b16 %v392
    %v1033 = vunpack.c.l.b16 %v393
    %v1034 = vunpack.c.h.b16 %v393
    %v1035 = vunpack.c.l.b16 %v394
    %v1036 = vunpack.c.h.b16 %v394
    %v1037 = vunpack.c.l.b16 %v395
    %v1038 = vunpack.c.h.b16 %v395
    %v1039 = vunpack.c.l.b16 %v396
    %v1040 = vunpack.c.h.b16 %v396
    %v1041 = vunpack.c.l.b16 %v397
    %v1042 = vunpack.c.h.b16 %v397
    %v1043 = vunpack.c.l.b16 %v398
    %v1044 = vunpack.c.h.b16 %v398
    %v1045 = vunpack.c.l.b16 %v399
    %v1046 = vunpack.c.h.b16 %v399
    %v1047 = vunpack.c.l.b16 %v400
    %v1048 = vunpack.c.h.b16 %v400
    %v1049 = vunpack.c.l.b16 %v401
    %v1050 = vunpack.c.h.b16 %v401
    %v1051 = vunpack.c.l.b16 %v402
    %v1052 = vunpack.c.h.b16 %v402
    %v1053 = vunpack.c.l.b16 %v403
    %v1054 = vunpack.c.h.b16 %v403
    %v1055 = vunpack.c.l.b16 %v404
    %v1056 = vunpack.c.h.b16 %v404
    %v1057 = vunpack.c.l.b16 %v405
    %v1058 = vunpack.c.h.b16 %v405
    %v1059 = vunpack.c.l.b16 %v406
    %v1060 = vunpack.c.h.b16 %v406
    %v1061 = vunpack.c.l.b16 %v407
    %v1062 = vunpack.c.h.b16 %v407
    %v1063 = vunpack.c.l.b16 %v408
    %v1064 = vunpack.c.h.b16 %v408
    %v1065 = vunpack.c.l.b16 %v409
    %v1066 = vunpack.c.h.b16 %v409
    %v1067 = vunpack.c.l.b16 %v410
    %v1068 = vunpack.c.h.b16 %v410
    %v1069 = vunpack.c.l.b16 %v411
    %v1070 = vunpack.c.h.b16 %v411
    %v1071 = vunpack.c.l.b16 %v412
    %v1072 = vunpack.c.h.b16 %v412
    %v1073 = vunpack.c.l.b16 %v413
    %v1074 = vunpack.c.h.b16 %v413
    %v1075 = vunpack.c.l.b16 %v414
    %v1076 = vunpack.c.h.b16 %v414
    %v1077 = vunpack.c.l.b16 %v415
    %v1078 = vunpack.c.h.b16 %v415
    %v1079 = vunpack.c.l.b16 %v416
    %v1080 = vunpack.c.h.b16 %v416
    %v1081 = vunpack.c.l.b16 %v417
    %v1082 = vunpack.c.h.b16 %v417
    %v1083 = vunpack.c.l.b16 %v418
    %v1084 = vunpack.c.h.b16 %v418
    %v1085 = vunpack.c.l.b16 %v419
    %v1086 = vunpack.c.h.b16 %v419
    %v1087 = vunpack.c.l.b16 %v420
    %v1088 = vunpack.c.h.b16 %v420
    %v1089 = vunpack.c.l.b16 %v421
    %v1090 = vunpack.c.h.b16 %v421
    %v1091 = vunpack.c.l.b16 %v422
    %v1092 = vunpack.c.h.b16 %v422
    %v1093 = vunpack.c.l.b16 %v423
    %v1094 = vunpack.c.h.b16 %v423
    %v1095 = vunpack.c.l.b16 %v424
    %v1096 = vunpack.c.h.b16 %v424
    %v1097 = vunpack.c.l.b16 %v425
    %v1098 = vunpack.c.h.b16 %v425
    %v1099 = vunpack.c.l.b16 %v426
    %v1100 = vunpack.c.h.b16 %v426
    %v1101 = vunpack.c.l.b16 %v427
    %v1102 = vunpack.c.h.b16 %v427
    %v1103 = vunpack.c.l.b16 %v428
    %v1104 = vunpack.c.h.b16 %v428
    %v1105 = vunpack.c.l.b16 %v429
    %v1106 = vunpack.c.h.b16 %v429
    %v1107 = vunpack.c.l.b16 %v430
    %v1108 = vunpack.c.h.b16 %v430
    %v1109 = vunpack.c.l.b16 %v431
    %v1110 = vunpack.c.h.b16 %v431
    %v1111 = vunpack.c.l.b16 %v432
    %v1112 = vunpack.c.h.b16 %v432
    %v1113 = vunpack.c.l.b16 %v433
    %v1114 = vunpack.c.h.b16 %v433
    %v1115 = vunpack.c.l.b16 %v434
    %v1116 = vunpack.c.h.b16 %v434
    %v1117 = vunpack.c.l.b16 %v435
    %v1118 = vunpack.c.h.b16 %v435
    %v1119 = vunpack.c.l.b16 %v436
    %v1120 = vunpack.c.h.b16 %v436
    %v1121 = vunpack.c.l.b16 %v437
    %v1122 = vunpack.c.h.b16 %v437
    %v1123 = vunpack.c.l.b16 %v438
    %v1124 = vunpack.c.h.b16 %v438
    %v1125 = vunpack.c.l.b16 %v439
    %v1126 = vunpack.c.h.b16 %v439
    %v1127 = vunpack.c.l.b16 %v440
    %v1128 = vunpack.c.h.b16 %v440
    %v1129 = vunpack.c.l.b16 %v441
    %v1130 = vunpack.c.h.b16 %v441
    %v1131 = vunpack.c.l.b16 %v442
    %v1132 = vunpack.c.h.b16 %v442
    %v1133 = vunpack.c.l.b16 %v443
    %v1134 = vunpack.c.h.b16 %v443
    %v1135 = vunpack.c.l.b16 %v444
    %v1136 = vunpack.c.h.b16 %v444
    %v1137 = vunpack.c.l.b16 %v445
    %v1138 = vunpack.c.h.b16 %v445
    %v1139 = vunpack.c.l.b16 %v446
    %v1140 = vunpack.c.h.b16 %v446
    %v1141 = vunpack.c.l.b16 %v447
    %v1142 = vunpack.c.h.b16 %v447
    %v1143 = vunpack.c.l.b16 %v448
    %v1144 = vunpack.c.h.b16 %v448
    %v1145 = vunpack.c.l.b16 %v449
    %v1146 = vunpack.c.h.b16 %v449
    %v1147 = vpack.c.b16 %v775, %v763
    %v1148 = vpack.c.b16 %v776, %v764
    %v1149 = vpack.c.b16 %v777, %v765
    %v1150 = vpack.c.b16 %v778, %v766
    %v1151 = vpack.c.b16 %v779, %v767
    %v1152 = vpack.c.b16 %v780, %v768
    %v1153 = vpack.c.b16 %v781, %v769
    %v1154 = vpack.c.b16 %v782, %v770
    %v1155 = vpack.c.b16 %v783, %v771
    %v1156 = vpack.c.b16 %v784, %v772
    %v1157 = vpack.c.b16 %v785, %v773
    %v1158 = vpack.c.b16 %v786, %v774
    %v1159 = vpack.c.b16 %v799, %v787
    %v1160 = vpack.c.b16 %v800, %v788
    %v1161 = vpack.c.b16 %v801, %v789
    %v1162 = vpack.c.b16 %v802, %v790
    %v1163 = vpack.c.b16 %v803, %v791
    %v1164 = vpack.c.b16 %v804, %v792
    %v1165 = vpack.c.b16 %v805, %v793
    %v1166 = vpack.c.b16 %v806, %v794
    %v1167 = vpack.c.b16 %v807, %v795
    %v1168 = vpack.c.b16 %v808, %v796
    %v1169 = vpack.c.b16 %v809, %v797
    %v1170 = vpack.c.b16 %v810, %v798
    %v1171 = vpack.c.b16 %v823, %v811
    %v1172 = vpack.c.b16 %v824, %v812
    %v1173 = vpack.c.b16 %v825, %v813
    %v1174 = vpack.c.b16 %v826, %v814
    %v1175 = vpack.c.b16 %v827, %v815
    %v1176 = vpack.c.b16 %v828, %v816
    %v1177 = vpack.c.b16 %v829, %v817
    %v1178 = vpack.c.b16 %v830, %v818
    %v1179 = vpack.c.b16 %v831, %v819
    %v1180 = vpack.c.b16 %v832, %v820
    %v1181 = vpack.c.b16 %v833, %v821
    %v1182 = vpack.c.b16 %v834, %v822
    %v1183 = vpack.c.b16 %v847, %v835
    %v1184 = vpack.c.b16 %v848, %v836
    %v1185 = vpack.c.b16 %v849, %v837
    %v1186 = vpack.c.b16 %v850, %v838
    %v1187 = vpack.c.b16 %v851, %v839
    %v1188 = vpack.c.b16 %v852, %v840
    %v1189 = vpack.c.b16 %v853, %v841
    %v1190 = vpack.c.b16 %v854, %v842
    %v1191 = vpack.c.b16 %v855, %v843
    %v1192 = vpack.c.b16 %v856, %v844
    %v1193 = vpack.c.b16 %v857, %v845
    %v1194 = vpack.c.b16 %v858, %v846
    %v1195 = vpack.c.b16 %v871, %v859
    %v1196 = vpack.c.b16 %v872, %v860
    %v1197 = vpack.c.b16 %v873, %v861
    %v1198 = vpack.c.b16 %v874, %v862
    %v1199 = vpack.c.b16 %v875, %v863
    %v1200 = vpack.c.b16 %v876, %v864
    %v1201 = vpack.c.b16 %v877, %v865
    %v1202 = vpack.c.b16 %v878, %v866
    %v1203 = vpack.c.b16 %v879, %v867
    %v1204 = vpack.c.b16 %v880, %v868
    %v1205 = vpack.c.b16 %v881, %v869
    %v1206 = vpack.c.b16 %v882, %v870
    %v1207 = vpack.c.b16 %v895, %v883
    %v1208 = vpack.c.b16 %v896, %v884
    %v1209 = vpack.c.b16 %v897, %v885
    %v1210 = vpack.c.b16 %v898, %v886
    %v1211 = vpack.c.b16 %v899, %v887
    %v1212 = vpack.c.b16 %v900, %v888
    %v1213 = vpack.c.b16 %v901, %v889
    %v1214 = vpack.c.b16 %v902, %v890
    %v1215 = vpack.c.b16 %v903, %v891
    %v1216 = vpack.c.b16 %v904, %v892
    %v1217 = vpack.c.b16 %v905, %v893
    %v1218 = vpack.c.b16 %v906, %v894
    %v1219 = vpack.c.b16 %v919, %v907
    %v1220 = vpack.c.b16 %v920, %v908
    %v1221 = vpack.c.b16 %v921, %v909
    %v1222 = vpack.c.b16 %v922, %v910
    %v1223 = vpack.c.b16 %v923, %v911
    %v1224 = vpack.c.b16 %v924, %v912
    %v1225 = vpack.c.b16 %v925, %v913
    %v1226 = vpack.c.b16 %v926, %v914
    %v1227 = vpack.c.b16 %v927, %v915
    %v1228 = vpack.c.b16 %v928, %v916
    %v1229 = vpack.c.b16 %v929, %v917
    %v1230 = vpack.c.b16 %v930, %v918
    %v1231 = vpack.c.b16 %v943, %v931
    %v1232 = vpack.c.b16 %v944, %v932
    %v1233 = vpack.c.b16 %v945, %v933
    %v1234 = vpack.c.b16 %v946, %v934
    %v1235 = vpack.c.b16 %v947, %v935
    %v1236 = vpack.c.b16 %v948, %v936
    %v1237 = vpack.c.b16 %v949, %v937
    %v1238 = vpack.c.b16 %v950, %v938
    %v1239 = vpack.c.b16 %v951, %v939
    %v1240 = vpack.c.b16 %v952, %v940
    %v1241 = vpack.c.b16 %v953, %v941
    %v1242 = vpack.c.b16 %v954, %v942
    %v1243 = vpack.c.b16 %v967, %v955
    %v1244 = vpack.c.b16 %v968, %v956
    %v1245 = vpack.c.b16 %v969, %v957
    %v1246 = vpack.c.b16 %v970, %v958
    %v1247 = vpack.c.b16 %v971, %v959
    %v1248 = vpack.c.b16 %v972, %v960
    %v1249 = vpack.c.b16 %v973, %v961
    %v1250 = vpack.c.b16 %v974, %v962
    %v1251 = vpack.c.b16 %v975, %v963
    %v1252 = vpack.c.b16 %v976, %v964
    %v1253 = vpack.c.b16 %v977, %v965
    %v1254 = vpack.c.b16 %v978, %v966
    %v1255 = vpack.c.b16 %v991, %v979
    %v1256 = vpack.c.b16 %v992, %v980
    %v1257 = vpack.c.b16 %v993, %v981
    %v1258 = vpack.c.b16 %v994, %v982
    %v1259 = vpack.c.b16 %v995, %v983
    %v1260 = vpack.c.b16 %v996, %v984
    %v1261 = vpack.c.b16 %v997, %v985
    %v1262 = vpack.c.b16 %v998, %v986
    %v1263 = vpack.c.b16 %v999, %v987
    %v1264 = vpack.c.b16 %v1000, %v988
    %v1265 = vpack.c.b16 %v1001, %v989
    %v1266 = vpack.c.b16 %v1002, %v990
    %v1267 = vpack.c.b16 %v1015, %v1003
    %v1268 = vpack.c.b16 %v1016, %v1004
    %v1269 = vpack.c.b16 %v1017, %v1005
    %v1270 = vpack.c.b16 %v1018, %v1006
    %v1271 = vpack.c.b16 %v1019, %v1007
    %v1272 = vpack.c.b16 %v1020, %v1008
    %v1273 = vpack.c.b16 %v1021, %v1009
    %v1274 = vpack.c.b16 %v1022, %v1010
    %v1275 = vpack.c.b16 %v1023, %v1011
    %v1276 = vpack.c.b16 %v1024, %v1012
    %v1277 = vpack.c.b16 %v1025, %v1013
    %v1278 = vpack.c.b16 %v1026, %v1014
    %v1279 = vpack.c.b16 %v1039, %v1027
    %v1280 = vpack.c.b16 %v1040, %v1028
    %v1281 = vpack.c.b16 %v1041, %v1029
    %v1282 = vpack.c.b16 %v1042, %v1030
    %v1283 = vpack.c.b16 %v1043, %v1031
    %v1284 = vpack.c.b16 %v1044, %v1032
    %v1285 = vpack.c.b16 %v1045, %v1033
    %v1286 = vpack.c.b16 %v1046, %v1034
    %v1287 = vpack.c.b16 %v1047, %v1035
    %v1288 = vpack.c.b16 %v1048, %v1036
    %v1289 = vpack.c.b16 %v1049, %v1037
    %v1290 = vpack.c.b16 %v1050, %v1038
    %v1291 = vpack.c.b16 %v1063, %v1051
    %v1292 = vpack.c.b16 %v1064, %v1052
    %v1293 = vpack.c.b16 %v1065, %v1053
    %v1294 = vpack.c.b16 %v1066, %v1054
    %v1295 = vpack.c.b16 %v1067, %v1055
    %v1296 = vpack.c.b16 %v1068, %v1056
    %v1297 = vpack.c.b16 %v1069, %v1057
    %v1298 = vpack.c.b16 %v1070, %v1058
    %v1299 = vpack.c.b16 %v1071, %v1059
    %v1300 = vpack.c.b16 %v1072, %v1060
    %v1301 = vpack.c.b16 %v1073, %v1061
    %v1302 = vpack.c.b16 %v1074, %v1062
    %v1303 = vpack.c.b16 %v1087, %v1075
    %v1304 = vpack.c.b16 %v1088, %v1076
    %v1305 = vpack.c.b16 %v1089, %v1077
    %v1306 = vpack.c.b16 %v1090, %v1078
    %v1307 = vpack.c.b16 %v1091, %v1079
    %v1308 = vpack.c.b16 %v1092, %v1080
    %v1309 = vpack.c.b16 %v1093, %v1081
    %v1310 = vpack.c.b16 %v1094, %v1082
    %v1311 = vpack.c.b16 %v1095, %v1083
    %v1312 = vpack.c.b16 %v1096, %v1084
    %v1313 = vpack.c.b16 %v1097, %v1085
    %v1314 = vpack.c.b16 %v1098, %v1086
    %v1315 = vpack.c.b16 %v1111, %v1099
    %v1316 = vpack.c.b16 %v1112, %v1100
    %v1317 = vpack.c.b16 %v1113, %v1101
    %v1318 = vpack.c.b16 %v1114, %v1102
    %v1319 = vpack.c.b16 %v1115, %v1103
    %v1320 = vpack.c.b16 %v1116, %v1104
    %v1321 = vpack.c.b16 %v1117, %v1105
    %v1322 = vpack.c.b16 %v1118, %v1106
    %v1323 = vpack.c.b16 %v1119, %v1107
    %v1324 = vpack.c.b16 %v1120, %v1108
    %v1325 = vpack.c.b16 %v1121, %v1109
    %v1326 = vpack.c.b16 %v1122, %v1110
    %v1327 = vpack.c.b16 %v1135, %v1123
    %v1328 = vpack.c.b16 %v1136, %v1124
    %v1329 = vpack.c.b16 %v1137, %v1125
    %v1330 = vpack.c.b16 %v1138, %v1126
    %v1331 = vpack.c.b16 %v1139, %v1127
    %v1332 = vpack.c.b16 %v1140, %v1128
    %v1333 = vpack.c.b16 %v1141, %v1129
    %v1334 = vpack.c.b16 %v1142, %v1130
    %v1335 = vpack.c.b16 %v1143, %v1131
    %v1336 = vpack.c.b16 %v1144, %v1132
    %v1337 = vpack.c.b16 %v1145, %v1133
    %v1338 = vpack.c.b16 %v1146, %v1134
    %1531 = vmatprep.subr.bf16.mxu0 %v1232
    %1532 = vmatpush1.bf16.msra.mxu0 %v1231
    %1533 = vmatprep.subr.bf16.mxu0 %v1220
    %1534 = vmatpush1.bf16.msra.mxu0 %v1219
    %1535 = vmatprep.subr.bf16.mxu0 %v1208
    %1536 = vmatpush1.bf16.msra.mxu0 %v1207
    %1537 = vmatprep.subr.bf16.mxu0 %v1196
    %1538 = vmatpush1.bf16.msra.mxu0 %v1195
    %1539 = vmatprep.subr.bf16.mxu0 %v1184
    %1540 = vmatpush1.bf16.msra.mxu0 %v1183
    %1541 = vmatprep.subr.bf16.mxu0 %v1172
    %1542 = vmatpush1.bf16.msra.mxu0 %v1171
    %1543 = vmatprep.subr.bf16.mxu0 %v1160
    %1544 = vmatpush1.bf16.msra.mxu0 %v1159
    %1545 = vmatprep.subr.bf16.mxu0 %v1148
    %1546 = vmatpush1.bf16.msra.mxu0 %v1147
    %1547 = vmatprep.subr.bf16.mxu0 %v1328
    %1548 = vmatpush2.bf16.msra.mxu0 %v1327
    %1549 = vmatprep.subr.bf16.mxu0 %v1316
    %1550 = vmatpush2.bf16.msra.mxu0 %v1315
    %1551 = vmatprep.subr.bf16.mxu0 %v1304
    %1552 = vmatpush2.bf16.msra.mxu0 %v1303
    %1553 = vmatprep.subr.bf16.mxu0 %v1292
    %1554 = vmatpush2.bf16.msra.mxu0 %v1291
    %1555 = vmatprep.subr.bf16.mxu0 %v1280
    %1556 = vmatpush2.bf16.msra.mxu0 %v1279
    %1557 = vmatprep.subr.bf16.mxu0 %v1268
    %1558 = vmatpush2.bf16.msra.mxu0 %v1267
    %1559 = vmatprep.subr.bf16.mxu0 %v1256
    %1560 = vmatpush2.bf16.msra.mxu0 %v1255
    %1561 = vmatprep.subr.bf16.mxu0 %v1244
    %1562 = vmatpush2.bf16.msra.mxu0 %v1243
    %1563 = vmatprep.mubr.bf16.mxu0 %v568
    %1564 = vmatmul.mubr.bf16.gmra.mxu0 %v567
    %v1565 = vpop.f32.mrf.mxu0
    %v1566 = vadd.f32 %v457, %v1565
    %v1567 = vpop.f32.mrf.mxu0
    %v1568 = vadd.f32 %v461, %v1567
    %v1569 = vpop.f32.mrf.mxu0
    %v1570 = vpop.f32.mrf.mxu0
    %1571 = vdwg.mxu0
    %1572 = vmatprep.subr.bf16.mxu0 %v1234
    %1573 = vmatpush1.bf16.msra.mxu0 %v1233
    %1574 = vmatprep.subr.bf16.mxu0 %v1222
    %1575 = vmatpush1.bf16.msra.mxu0 %v1221
    %1576 = vmatprep.subr.bf16.mxu0 %v1210
    %1577 = vmatpush1.bf16.msra.mxu0 %v1209
    %1578 = vmatprep.subr.bf16.mxu0 %v1198
    %1579 = vmatpush1.bf16.msra.mxu0 %v1197
    %1580 = vmatprep.subr.bf16.mxu0 %v1186
    %1581 = vmatpush1.bf16.msra.mxu0 %v1185
    %1582 = vmatprep.subr.bf16.mxu0 %v1174
    %1583 = vmatpush1.bf16.msra.mxu0 %v1173
    %1584 = vmatprep.subr.bf16.mxu0 %v1162
    %1585 = vmatpush1.bf16.msra.mxu0 %v1161
    %1586 = vmatprep.subr.bf16.mxu0 %v1150
    %1587 = vmatpush1.bf16.msra.mxu0 %v1149
    %1588 = vmatprep.subr.bf16.mxu0 %v1330
    %1589 = vmatpush2.bf16.msra.mxu0 %v1329
    %1590 = vmatprep.subr.bf16.mxu0 %v1318
    %1591 = vmatpush2.bf16.msra.mxu0 %v1317
    %1592 = vmatprep.subr.bf16.mxu0 %v1306
    %1593 = vmatpush2.bf16.msra.mxu0 %v1305
    %1594 = vmatprep.subr.bf16.mxu0 %v1294
    %1595 = vmatpush2.bf16.msra.mxu0 %v1293
    %1596 = vmatprep.subr.bf16.mxu0 %v1282
    %1597 = vmatpush2.bf16.msra.mxu0 %v1281
    %1598 = vmatprep.subr.bf16.mxu0 %v1270
    %1599 = vmatpush2.bf16.msra.mxu0 %v1269
    %1600 = vmatprep.subr.bf16.mxu0 %v1258
    %1601 = vmatpush2.bf16.msra.mxu0 %v1257
    %1602 = vmatprep.subr.bf16.mxu0 %v1246
    %1603 = vmatpush2.bf16.msra.mxu0 %v1245
    %1604 = vmatprep.mubr.bf16.mxu0 %v568
    %1605 = vmatmul.mubr.bf16.gmra.mxu0 %v567
    %v1606 = vpop.f32.mrf.mxu0
    %v1607 = vadd.f32 %v465, %v1606
    %v1608 = vpop.f32.mrf.mxu0
    %v1609 = vadd.f32 %v469, %v1608
    %v1610 = vpop.f32.mrf.mxu0
    %v1611 = vpop.f32.mrf.mxu0
    %1612 = vdwg.mxu0
    %1613 = vmatprep.subr.bf16.mxu0 %v1236
    %1614 = vmatpush1.bf16.msra.mxu0 %v1235
    %1615 = vmatprep.subr.bf16.mxu0 %v1224
    %1616 = vmatpush1.bf16.msra.mxu0 %v1223
    %1617 = vmatprep.subr.bf16.mxu0 %v1212
    %1618 = vmatpush1.bf16.msra.mxu0 %v1211
    %1619 = vmatprep.subr.bf16.mxu0 %v1200
    %1620 = vmatpush1.bf16.msra.mxu0 %v1199
    %1621 = vmatprep.subr.bf16.mxu0 %v1188
    %1622 = vmatpush1.bf16.msra.mxu0 %v1187
    %1623 = vmatprep.subr.bf16.mxu0 %v1176
    %1624 = vmatpush1.bf16.msra.mxu0 %v1175
    %1625 = vmatprep.subr.bf16.mxu0 %v1164
    %1626 = vmatpush1.bf16.msra.mxu0 %v1163
    %1627 = vmatprep.subr.bf16.mxu0 %v1152
    %1628 = vmatpush1.bf16.msra.mxu0 %v1151
    %1629 = vmatprep.subr.bf16.mxu0 %v1332
    %1630 = vmatpush2.bf16.msra.mxu0 %v1331
    %1631 = vmatprep.subr.bf16.mxu0 %v1320
    %1632 = vmatpush2.bf16.msra.mxu0 %v1319
    %1633 = vmatprep.subr.bf16.mxu0 %v1308
    %1634 = vmatpush2.bf16.msra.mxu0 %v1307
    %1635 = vmatprep.subr.bf16.mxu0 %v1296
    %1636 = vmatpush2.bf16.msra.mxu0 %v1295
    %1637 = vmatprep.subr.bf16.mxu0 %v1284
    %1638 = vmatpush2.bf16.msra.mxu0 %v1283
    %1639 = vmatprep.subr.bf16.mxu0 %v1272
    %1640 = vmatpush2.bf16.msra.mxu0 %v1271
    %1641 = vmatprep.subr.bf16.mxu0 %v1260
    %1642 = vmatpush2.bf16.msra.mxu0 %v1259
    %1643 = vmatprep.subr.bf16.mxu0 %v1248
    %1644 = vmatpush2.bf16.msra.mxu0 %v1247
    %1645 = vmatprep.mubr.bf16.mxu0 %v568
    %1646 = vmatmul.mubr.bf16.gmra.mxu0 %v567
    %v1647 = vpop.f32.mrf.mxu0
    %v1648 = vadd.f32 %v473, %v1647
    %v1649 = vpop.f32.mrf.mxu0
    %v1650 = vadd.f32 %v477, %v1649
    %v1651 = vpop.f32.mrf.mxu0
    %v1652 = vpop.f32.mrf.mxu0
    %1653 = vdwg.mxu0
    %1654 = vmatprep.subr.bf16.mxu0 %v1238
    %1655 = vmatpush1.bf16.msra.mxu0 %v1237
    %1656 = vmatprep.subr.bf16.mxu0 %v1226
    %1657 = vmatpush1.bf16.msra.mxu0 %v1225
    %1658 = vmatprep.subr.bf16.mxu0 %v1214
    %1659 = vmatpush1.bf16.msra.mxu0 %v1213
    %1660 = vmatprep.subr.bf16.mxu0 %v1202
    %1661 = vmatpush1.bf16.msra.mxu0 %v1201
    %1662 = vmatprep.subr.bf16.mxu0 %v1190
    %1663 = vmatpush1.bf16.msra.mxu0 %v1189
    %1664 = vmatprep.subr.bf16.mxu0 %v1178
    %1665 = vmatpush1.bf16.msra.mxu0 %v1177
    %1666 = vmatprep.subr.bf16.mxu0 %v1166
    %1667 = vmatpush1.bf16.msra.mxu0 %v1165
    %1668 = vmatprep.subr.bf16.mxu0 %v1154
    %1669 = vmatpush1.bf16.msra.mxu0 %v1153
    %1670 = vmatprep.subr.bf16.mxu0 %v1334
    %1671 = vmatpush2.bf16.msra.mxu0 %v1333
    %1672 = vmatprep.subr.bf16.mxu0 %v1322
    %1673 = vmatpush2.bf16.msra.mxu0 %v1321
    %1674 = vmatprep.subr.bf16.mxu0 %v1310
    %1675 = vmatpush2.bf16.msra.mxu0 %v1309
    %1676 = vmatprep.subr.bf16.mxu0 %v1298
    %1677 = vmatpush2.bf16.msra.mxu0 %v1297
    %1678 = vmatprep.subr.bf16.mxu0 %v1286
    %1679 = vmatpush2.bf16.msra.mxu0 %v1285
    %1680 = vmatprep.subr.bf16.mxu0 %v1274
    %1681 = vmatpush2.bf16.msra.mxu0 %v1273
    %1682 = vmatprep.subr.bf16.mxu0 %v1262
    %1683 = vmatpush2.bf16.msra.mxu0 %v1261
    %1684 = vmatprep.subr.bf16.mxu0 %v1250
    %1685 = vmatpush2.bf16.msra.mxu0 %v1249
    %1686 = vmatprep.mubr.bf16.mxu0 %v568
    %1687 = vmatmul.mubr.bf16.gmra.mxu0 %v567
    %v1688 = vpop.f32.mrf.mxu0
    %v1689 = vadd.f32 %v481, %v1688
    %v1690 = vpop.f32.mrf.mxu0
    %v1691 = vadd.f32 %v485, %v1690
    %v1692 = vpop.f32.mrf.mxu0
    %v1693 = vpop.f32.mrf.mxu0
    %1694 = vdwg.mxu0
    %1695 = vmatprep.subr.bf16.mxu0 %v1240
    %1696 = vmatpush1.bf16.msra.mxu0 %v1239
    %1697 = vmatprep.subr.bf16.mxu0 %v1228
    %1698 = vmatpush1.bf16.msra.mxu0 %v1227
    %1699 = vmatprep.subr.bf16.mxu0 %v1216
    %1700 = vmatpush1.bf16.msra.mxu0 %v1215
    %1701 = vmatprep.subr.bf16.mxu0 %v1204
    %1702 = vmatpush1.bf16.msra.mxu0 %v1203
    %1703 = vmatprep.subr.bf16.mxu0 %v1192
    %1704 = vmatpush1.bf16.msra.mxu0 %v1191
    %1705 = vmatprep.subr.bf16.mxu0 %v1180
    %1706 = vmatpush1.bf16.msra.mxu0 %v1179
    %1707 = vmatprep.subr.bf16.mxu0 %v1168
    %1708 = vmatpush1.bf16.msra.mxu0 %v1167
    %1709 = vmatprep.subr.bf16.mxu0 %v1156
    %1710 = vmatpush1.bf16.msra.mxu0 %v1155
    %1711 = vmatprep.subr.bf16.mxu0 %v1336
    %1712 = vmatpush2.bf16.msra.mxu0 %v1335
    %1713 = vmatprep.subr.bf16.mxu0 %v1324
    %1714 = vmatpush2.bf16.msra.mxu0 %v1323
    %1715 = vmatprep.subr.bf16.mxu0 %v1312
    %1716 = vmatpush2.bf16.msra.mxu0 %v1311
    %1717 = vmatprep.subr.bf16.mxu0 %v1300
    %1718 = vmatpush2.bf16.msra.mxu0 %v1299
    %1719 = vmatprep.subr.bf16.mxu0 %v1288
    %1720 = vmatpush2.bf16.msra.mxu0 %v1287
    %1721 = vmatprep.subr.bf16.mxu0 %v1276
    %1722 = vmatpush2.bf16.msra.mxu0 %v1275
    %1723 = vmatprep.subr.bf16.mxu0 %v1264
    %1724 = vmatpush2.bf16.msra.mxu0 %v1263
    %1725 = vmatprep.subr.bf16.mxu0 %v1252
    %1726 = vmatpush2.bf16.msra.mxu0 %v1251
    %1727 = vmatprep.mubr.bf16.mxu0 %v568
    %1728 = vmatmul.mubr.bf16.gmra.mxu0 %v567
    %v1729 = vpop.f32.mrf.mxu0
    %v1730 = vadd.f32 %v489, %v1729
    %v1731 = vpop.f32.mrf.mxu0
    %v1732 = vadd.f32 %v493, %v1731
    %v1733 = vpop.f32.mrf.mxu0
    %v1734 = vpop.f32.mrf.mxu0
    %1735 = vdwg.mxu0
    %1736 = vmatprep.subr.bf16.mxu0 %v1242
    %1737 = vmatpush1.bf16.msra.mxu0 %v1241
    %1738 = vmatprep.subr.bf16.mxu0 %v1230
    %1739 = vmatpush1.bf16.msra.mxu0 %v1229
    %1740 = vmatprep.subr.bf16.mxu0 %v1218
    %1741 = vmatpush1.bf16.msra.mxu0 %v1217
    %1742 = vmatprep.subr.bf16.mxu0 %v1206
    %1743 = vmatpush1.bf16.msra.mxu0 %v1205
    %1744 = vmatprep.subr.bf16.mxu0 %v1194
    %1745 = vmatpush1.bf16.msra.mxu0 %v1193
    %1746 = vmatprep.subr.bf16.mxu0 %v1182
    %1747 = vmatpush1.bf16.msra.mxu0 %v1181
    %1748 = vmatprep.subr.bf16.mxu0 %v1170
    %1749 = vmatpush1.bf16.msra.mxu0 %v1169
    %1750 = vmatprep.subr.bf16.mxu0 %v1158
    %1751 = vmatpush1.bf16.msra.mxu0 %v1157
    %1752 = vmatprep.subr.bf16.mxu0 %v1338
    %1753 = vmatpush2.bf16.msra.mxu0 %v1337
    %1754 = vmatprep.subr.bf16.mxu0 %v1326
    %1755 = vmatpush2.bf16.msra.mxu0 %v1325
    %1756 = vmatprep.subr.bf16.mxu0 %v1314
    %1757 = vmatpush2.bf16.msra.mxu0 %v1313
    %1758 = vmatprep.subr.bf16.mxu0 %v1302
    %1759 = vmatpush2.bf16.msra.mxu0 %v1301
    %1760 = vmatprep.subr.bf16.mxu0 %v1290
    %1761 = vmatpush2.bf16.msra.mxu0 %v1289
    %1762 = vmatprep.subr.bf16.mxu0 %v1278
    %1763 = vmatpush2.bf16.msra.mxu0 %v1277
    %1764 = vmatprep.subr.bf16.mxu0 %v1266
    %1765 = vmatpush2.bf16.msra.mxu0 %v1265
    %1766 = vmatprep.subr.bf16.mxu0 %v1254
    %1767 = vmatpush2.bf16.msra.mxu0 %v1253
    %1768 = vmatprep.mubr.bf16.mxu0 %v568
    %1769 = vmatmul.mubr.bf16.gmra.mxu0 %v567
    %v1770 = vpop.f32.mrf.mxu0
    %v1771 = vadd.f32 %v497, %v1770
    %v1772 = vpop.f32.mrf.mxu0
    %v1773 = vadd.f32 %v501, %v1772
    %v1774 = vpop.f32.mrf.mxu0
    %v1775 = vpop.f32.mrf.mxu0
    %1776 = vdwg.mxu0
    %v1777 = vmul.f32 %v1566, 0.5
    %v1778 = vmul.f32 %v1568, 0.5
    %v1779 = vmul.f32 %v1607, 0.5
    %v1780 = vmul.f32 %v1609, 0.5
    %v1781 = vmul.f32 %v1648, 0.5
    %v1782 = vmul.f32 %v1650, 0.5
    %v1783 = vmul.f32 %v1689, 0.5
    %v1784 = vmul.f32 %v1691, 0.5
    %v1785 = vmul.f32 %v1730, 0.5
    %v1786 = vmul.f32 %v1732, 0.5
    %v1787 = vmul.f32 %v1771, 0.5
    %v1788 = vmul.f32 %v1773, 0.5
    %v1789 = vmul.f32 %v1566, 0.044715
    %v1790 = vmul.f32 %v1568, 0.044715
    %v1791 = vmul.f32 %v1607, 0.044715
    %v1792 = vmul.f32 %v1609, 0.044715
    %v1793 = vmul.f32 %v1648, 0.044715
    %v1794 = vmul.f32 %v1650, 0.044715
    %v1795 = vmul.f32 %v1689, 0.044715
    %v1796 = vmul.f32 %v1691, 0.044715
    %v1797 = vmul.f32 %v1730, 0.044715
    %v1798 = vmul.f32 %v1732, 0.044715
    %v1799 = vmul.f32 %v1771, 0.044715
    %v1800 = vmul.f32 %v1773, 0.044715
    %v1801 = vmul.f32 %v1789, %v1566
    %v1802 = vmul.f32 %v1790, %v1568
    %v1803 = vmul.f32 %v1791, %v1607
    %v1804 = vmul.f32 %v1792, %v1609
    %v1805 = vmul.f32 %v1793, %v1648
    %v1806 = vmul.f32 %v1794, %v1650
    %v1807 = vmul.f32 %v1795, %v1689
    %v1808 = vmul.f32 %v1796, %v1691
    %v1809 = vmul.f32 %v1797, %v1730
    %v1810 = vmul.f32 %v1798, %v1732
    %v1811 = vmul.f32 %v1799, %v1771
    %v1812 = vmul.f32 %v1800, %v1773
    %v1813 = vmul.f32 %v1801, %v1566
    %v1814 = vmul.f32 %v1802, %v1568
    %v1815 = vmul.f32 %v1803, %v1607
    %v1816 = vmul.f32 %v1804, %v1609
    %v1817 = vmul.f32 %v1805, %v1648
    %v1818 = vmul.f32 %v1806, %v1650
    %v1819 = vmul.f32 %v1807, %v1689
    %v1820 = vmul.f32 %v1808, %v1691
    %v1821 = vmul.f32 %v1809, %v1730
    %v1822 = vmul.f32 %v1810, %v1732
    %v1823 = vmul.f32 %v1811, %v1771
    %v1824 = vmul.f32 %v1812, %v1773
    %v1825 = vadd.f32 %v1566, %v1813
    %v1826 = vadd.f32 %v1568, %v1814
    %v1827 = vadd.f32 %v1607, %v1815
    %v1828 = vadd.f32 %v1609, %v1816
    %v1829 = vadd.f32 %v1648, %v1817
    %v1830 = vadd.f32 %v1650, %v1818
    %v1831 = vadd.f32 %v1689, %v1819
    %v1832 = vadd.f32 %v1691, %v1820
    %v1833 = vadd.f32 %v1730, %v1821
    %v1834 = vadd.f32 %v1732, %v1822
    %v1835 = vadd.f32 %v1771, %v1823
    %v1836 = vadd.f32 %v1773, %v1824
    %v1837 = vmul.f32 %v1825, 0.7978846
    %v1838 = vmul.f32 %v1826, 0.7978846
    %v1839 = vmul.f32 %v1827, 0.7978846
    %v1840 = vmul.f32 %v1828, 0.7978846
    %v1841 = vmul.f32 %v1829, 0.7978846
    %v1842 = vmul.f32 %v1830, 0.7978846
    %v1843 = vmul.f32 %v1831, 0.7978846
    %v1844 = vmul.f32 %v1832, 0.7978846
    %v1845 = vmul.f32 %v1833, 0.7978846
    %v1846 = vmul.f32 %v1834, 0.7978846
    %v1847 = vmul.f32 %v1835, 0.7978846
    %v1848 = vmul.f32 %v1836, 0.7978846
    %v1849 = vtanh.pop %v1837
    %v1850 = vtanh.pop %v1838
    %v1851 = vtanh.pop %v1839
    %v1852 = vtanh.pop %v1840
    %v1853 = vtanh.pop %v1841
    %v1854 = vtanh.pop %v1842
    %v1855 = vtanh.pop %v1843
    %v1856 = vtanh.pop %v1844
    %v1857 = vtanh.pop %v1845
    %v1858 = vtanh.pop %v1846
    %v1859 = vtanh.pop %v1847
    %v1860 = vtanh.pop %v1848
    %v1861 = vadd.f32 %v1849, 1.0
    %v1862 = vadd.f32 %v1850, 1.0
    %v1863 = vadd.f32 %v1851, 1.0
    %v1864 = vadd.f32 %v1852, 1.0
    %v1865 = vadd.f32 %v1853, 1.0
    %v1866 = vadd.f32 %v1854, 1.0
    %v1867 = vadd.f32 %v1855, 1.0
    %v1868 = vadd.f32 %v1856, 1.0
    %v1869 = vadd.f32 %v1857, 1.0
    %v1870 = vadd.f32 %v1858, 1.0
    %v1871 = vadd.f32 %v1859, 1.0
    %v1872 = vadd.f32 %v1860, 1.0
    %v1873 = vmul.f32 %v1777, %v1861
    %v1874 = vmul.f32 %v1778, %v1862
    %v1875 = vmul.f32 %v1779, %v1863
    %v1876 = vmul.f32 %v1780, %v1864
    %v1877 = vmul.f32 %v1781, %v1865
    %v1878 = vmul.f32 %v1782, %v1866
    %v1879 = vmul.f32 %v1783, %v1867
    %v1880 = vmul.f32 %v1784, %v1868
    %v1881 = vmul.f32 %v1785, %v1869
    %v1882 = vmul.f32 %v1786, %v1870
    %v1883 = vmul.f32 %v1787, %v1871
    %v1884 = vmul.f32 %v1788, %v1872
    %v1885 = vpack.c.bf16 %v1873, %v1873
    %v1886 = vpack.c.bf16 %v1874, %v1874
    %v1887 = vpack.c.bf16 %v1875, %v1875
    %v1888 = vpack.c.bf16 %v1876, %v1876
    %v1889 = vpack.c.bf16 %v1877, %v1877
    %v1890 = vpack.c.bf16 %v1878, %v1878
    %v1891 = vpack.c.bf16 %v1879, %v1879
    %v1892 = vpack.c.bf16 %v1880, %v1880
    %v1893 = vpack.c.bf16 %v1881, %v1881
    %v1894 = vpack.c.bf16 %v1882, %v1882
    %v1895 = vpack.c.bf16 %v1883, %v1883
    %v1896 = vpack.c.bf16 %v1884, %v1884
    %v1897 = vld [vmem:[%s5] sm:$0xf]
    %v1898 = vld [vmem:[%s5 + $0x4] sm:$0xf]
    %v1899 = vld [vmem:[%s5 + $0x8] sm:$0xf]
    %v1900 = vld [vmem:[%s5 + $0xc] sm:$0xf]
    %v1901 = vld [vmem:[%s5 + $0x10] sm:$0xf]
    %v1902 = vld [vmem:[%s5 + $0x14] sm:$0xf]
    %v1903 = vld [vmem:[%s5 + $0x18] sm:$0xf]
    %v1904 = vld [vmem:[%s5 + $0x1c] sm:$0xf]
    %v1905 = vld [vmem:[%s5 + $0x20] sm:$0xf]
    %v1906 = vld [vmem:[%s5 + $0x24] sm:$0xf]
    %v1907 = vld [vmem:[%s5 + $0x28] sm:$0xf]
    %v1908 = vld [vmem:[%s5 + $0x2c] sm:$0xf]
    %v1909 = vld [vmem:[%s5 + $0x30] sm:$0xf]
    %v1910 = vld [vmem:[%s5 + $0x34] sm:$0xf]
    %v1911 = vld [vmem:[%s5 + $0x38] sm:$0xf]
    %v1912 = vld [vmem:[%s5 + $0x3c] sm:$0xf]
    %v1913 = vld [vmem:[%s5 + $0x40] sm:$0xf]
    %v1914 = vld [vmem:[%s5 + $0x44] sm:$0xf]
    %v1915 = vld [vmem:[%s5 + $0x48] sm:$0xf]
    %v1916 = vld [vmem:[%s5 + $0x4c] sm:$0xf]
    %v1917 = vld [vmem:[%s5 + $0x50] sm:$0xf]
    %v1918 = vld [vmem:[%s5 + $0x54] sm:$0xf]
    %v1919 = vld [vmem:[%s5 + $0x58] sm:$0xf]
    %v1920 = vld [vmem:[%s5 + $0x5c] sm:$0xf]
    %v1921 = vld [vmem:[%s5 + $0x60] sm:$0xf]
    %v1922 = vld [vmem:[%s5 + $0x64] sm:$0xf]
    %v1923 = vld [vmem:[%s5 + $0x68] sm:$0xf]
    %v1924 = vld [vmem:[%s5 + $0x6c] sm:$0xf]
    %v1925 = vld [vmem:[%s5 + $0x70] sm:$0xf]
    %v1926 = vld [vmem:[%s5 + $0x74] sm:$0xf]
    %v1927 = vld [vmem:[%s5 + $0x78] sm:$0xf]
    %v1928 = vld [vmem:[%s5 + $0x7c] sm:$0xf]
    %v1929 = vld [vmem:[%s5 + $0x80] sm:$0xf]
    %v1930 = vld [vmem:[%s5 + $0x84] sm:$0xf]
    %v1931 = vld [vmem:[%s5 + $0x88] sm:$0xf]
    %v1932 = vld [vmem:[%s5 + $0x8c] sm:$0xf]
    %v1933 = vld [vmem:[%s5 + $0x90] sm:$0xf]
    %v1934 = vld [vmem:[%s5 + $0x94] sm:$0xf]
    %v1935 = vld [vmem:[%s5 + $0x98] sm:$0xf]
    %v1936 = vld [vmem:[%s5 + $0x9c] sm:$0xf]
    %v1937 = vld [vmem:[%s5 + $0xa0] sm:$0xf]
    %v1938 = vld [vmem:[%s5 + $0xa4] sm:$0xf]
    %v1939 = vld [vmem:[%s5 + $0xa8] sm:$0xf]
    %v1940 = vld [vmem:[%s5 + $0xac] sm:$0xf]
    %v1941 = vld [vmem:[%s5 + $0xb0] sm:$0xf]
    %v1942 = vld [vmem:[%s5 + $0xb4] sm:$0xf]
    %v1943 = vld [vmem:[%s5 + $0xb8] sm:$0xf]
    %v1944 = vld [vmem:[%s5 + $0xbc] sm:$0xf]
    %v1945 = vld [vmem:[%s5 + $0xc0] sm:$0xf]
    %v1946 = vld [vmem:[%s5 + $0xc4] sm:$0xf]
    %v1947 = vld [vmem:[%s5 + $0xc8] sm:$0xf]
    %v1948 = vld [vmem:[%s5 + $0xcc] sm:$0xf]
    %v1949 = vld [vmem:[%s5 + $0xd0] sm:$0xf]
    %v1950 = vld [vmem:[%s5 + $0xd4] sm:$0xf]
    %v1951 = vld [vmem:[%s5 + $0xd8] sm:$0xf]
    %v1952 = vld [vmem:[%s5 + $0xdc] sm:$0xf]
    %v1953 = vld [vmem:[%s5 + $0xe0] sm:$0xf]
    %v1954 = vld [vmem:[%s5 + $0xe4] sm:$0xf]
    %v1955 = vld [vmem:[%s5 + $0xe8] sm:$0xf]
    %v1956 = vld [vmem:[%s5 + $0xec] sm:$0xf]
    %v1957 = vld [vmem:[%s5 + $0xf0] sm:$0xf]
    %v1958 = vld [vmem:[%s5 + $0xf4] sm:$0xf]
    %v1959 = vld [vmem:[%s5 + $0xf8] sm:$0xf]
    %v1960 = vld [vmem:[%s5 + $0xfc] sm:$0xf]
    %v1961 = vld [vmem:[%s5 + $0x100] sm:$0xf]
    %v1962 = vld [vmem:[%s5 + $0x104] sm:$0xf]
    %v1963 = vld [vmem:[%s5 + $0x108] sm:$0xf]
    %v1964 = vld [vmem:[%s5 + $0x10c] sm:$0xf]
    %v1965 = vld [vmem:[%s5 + $0x110] sm:$0xf]
    %v1966 = vld [vmem:[%s5 + $0x114] sm:$0xf]
    %v1967 = vld [vmem:[%s5 + $0x118] sm:$0xf]
    %v1968 = vld [vmem:[%s5 + $0x11c] sm:$0xf]
    %v1969 = vld [vmem:[%s5 + $0x120] sm:$0xf]
    %v1970 = vld [vmem:[%s5 + $0x124] sm:$0xf]
    %v1971 = vld [vmem:[%s5 + $0x128] sm:$0xf]
    %v1972 = vld [vmem:[%s5 + $0x12c] sm:$0xf]
    %v1973 = vld [vmem:[%s5 + $0x130] sm:$0xf]
    %v1974 = vld [vmem:[%s5 + $0x134] sm:$0xf]
    %v1975 = vld [vmem:[%s5 + $0x138] sm:$0xf]
    %v1976 = vld [vmem:[%s5 + $0x13c] sm:$0xf]
    %v1977 = vld [vmem:[%s5 + $0x140] sm:$0xf]
    %v1978 = vld [vmem:[%s5 + $0x144] sm:$0xf]
    %v1979 = vld [vmem:[%s5 + $0x148] sm:$0xf]
    %v1980 = vld [vmem:[%s5 + $0x14c] sm:$0xf]
    %v1981 = vld [vmem:[%s5 + $0x150] sm:$0xf]
    %v1982 = vld [vmem:[%s5 + $0x154] sm:$0xf]
    %v1983 = vld [vmem:[%s5 + $0x158] sm:$0xf]
    %v1984 = vld [vmem:[%s5 + $0x15c] sm:$0xf]
    %v1985 = vld [vmem:[%s5 + $0x160] sm:$0xf]
    %v1986 = vld [vmem:[%s5 + $0x164] sm:$0xf]
    %v1987 = vld [vmem:[%s5 + $0x168] sm:$0xf]
    %v1988 = vld [vmem:[%s5 + $0x16c] sm:$0xf]
    %v1989 = vld [vmem:[%s5 + $0x170] sm:$0xf]
    %v1990 = vld [vmem:[%s5 + $0x174] sm:$0xf]
    %v1991 = vld [vmem:[%s5 + $0x178] sm:$0xf]
    %v1992 = vld [vmem:[%s5 + $0x17c] sm:$0xf]
    %v1993 = vld [vmem:[%s5 + $0x180] sm:$0xf]
    %v1994 = vld [vmem:[%s5 + $0x184] sm:$0xf]
    %v1995 = vld [vmem:[%s5 + $0x188] sm:$0xf]
    %v1996 = vld [vmem:[%s5 + $0x18c] sm:$0xf]
    %v1997 = vld [vmem:[%s5 + $0x190] sm:$0xf]
    %v1998 = vld [vmem:[%s5 + $0x194] sm:$0xf]
    %v1999 = vld [vmem:[%s5 + $0x198] sm:$0xf]
    %v2000 = vld [vmem:[%s5 + $0x19c] sm:$0xf]
    %v2001 = vld [vmem:[%s5 + $0x1a0] sm:$0xf]
    %v2002 = vld [vmem:[%s5 + $0x1a4] sm:$0xf]
    %v2003 = vld [vmem:[%s5 + $0x1a8] sm:$0xf]
    %v2004 = vld [vmem:[%s5 + $0x1ac] sm:$0xf]
    %v2005 = vld [vmem:[%s5 + $0x1b0] sm:$0xf]
    %v2006 = vld [vmem:[%s5 + $0x1b4] sm:$0xf]
    %v2007 = vld [vmem:[%s5 + $0x1b8] sm:$0xf]
    %v2008 = vld [vmem:[%s5 + $0x1bc] sm:$0xf]
    %v2009 = vld [vmem:[%s5 + $0x1c0] sm:$0xf]
    %v2010 = vld [vmem:[%s5 + $0x1c4] sm:$0xf]
    %v2011 = vld [vmem:[%s5 + $0x1c8] sm:$0xf]
    %v2012 = vld [vmem:[%s5 + $0x1cc] sm:$0xf]
    %v2013 = vld [vmem:[%s5 + $0x1d0] sm:$0xf]
    %v2014 = vld [vmem:[%s5 + $0x1d4] sm:$0xf]
    %v2015 = vld [vmem:[%s5 + $0x1d8] sm:$0xf]
    %v2016 = vld [vmem:[%s5 + $0x1dc] sm:$0xf]
    %v2017 = vld [vmem:[%s5 + $0x1e0] sm:$0xf]
    %v2018 = vld [vmem:[%s5 + $0x1e4] sm:$0xf]
    %v2019 = vld [vmem:[%s5 + $0x1e8] sm:$0xf]
    %v2020 = vld [vmem:[%s5 + $0x1ec] sm:$0xf]
    %v2021 = vld [vmem:[%s5 + $0x1f0] sm:$0xf]
    %v2022 = vld [vmem:[%s5 + $0x1f4] sm:$0xf]
    %v2023 = vld [vmem:[%s5 + $0x1f8] sm:$0xf]
    %v2024 = vld [vmem:[%s5 + $0x1fc] sm:$0xf]
    %v2025 = vld [vmem:[%s5 + $0x200] sm:$0xf]
    %v2026 = vld [vmem:[%s5 + $0x204] sm:$0xf]
    %v2027 = vld [vmem:[%s5 + $0x208] sm:$0xf]
    %v2028 = vld [vmem:[%s5 + $0x20c] sm:$0xf]
    %v2029 = vld [vmem:[%s5 + $0x210] sm:$0xf]
    %v2030 = vld [vmem:[%s5 + $0x214] sm:$0xf]
    %v2031 = vld [vmem:[%s5 + $0x218] sm:$0xf]
    %v2032 = vld [vmem:[%s5 + $0x21c] sm:$0xf]
    %v2033 = vld [vmem:[%s5 + $0x220] sm:$0xf]
    %v2034 = vld [vmem:[%s5 + $0x224] sm:$0xf]
    %v2035 = vld [vmem:[%s5 + $0x228] sm:$0xf]
    %v2036 = vld [vmem:[%s5 + $0x22c] sm:$0xf]
    %v2037 = vld [vmem:[%s5 + $0x230] sm:$0xf]
    %v2038 = vld [vmem:[%s5 + $0x234] sm:$0xf]
    %v2039 = vld [vmem:[%s5 + $0x238] sm:$0xf]
    %v2040 = vld [vmem:[%s5 + $0x23c] sm:$0xf]
    %v2041 = vld [vmem:[%s5 + $0x240] sm:$0xf]
    %v2042 = vld [vmem:[%s5 + $0x244] sm:$0xf]
    %v2043 = vld [vmem:[%s5 + $0x248] sm:$0xf]
    %v2044 = vld [vmem:[%s5 + $0x24c] sm:$0xf]
    %v2045 = vld [vmem:[%s5 + $0x250] sm:$0xf]
    %v2046 = vld [vmem:[%s5 + $0x254] sm:$0xf]
    %v2047 = vld [vmem:[%s5 + $0x258] sm:$0xf]
    %v2048 = vld [vmem:[%s5 + $0x25c] sm:$0xf]
    %v2049 = vld [vmem:[%s5 + $0x260] sm:$0xf]
    %v2050 = vld [vmem:[%s5 + $0x264] sm:$0xf]
    %v2051 = vld [vmem:[%s5 + $0x268] sm:$0xf]
    %v2052 = vld [vmem:[%s5 + $0x26c] sm:$0xf]
    %v2053 = vld [vmem:[%s5 + $0x270] sm:$0xf]
    %v2054 = vld [vmem:[%s5 + $0x274] sm:$0xf]
    %v2055 = vld [vmem:[%s5 + $0x278] sm:$0xf]
    %v2056 = vld [vmem:[%s5 + $0x27c] sm:$0xf]
    %v2057 = vld [vmem:[%s5 + $0x280] sm:$0xf]
    %v2058 = vld [vmem:[%s5 + $0x284] sm:$0xf]
    %v2059 = vld [vmem:[%s5 + $0x288] sm:$0xf]
    %v2060 = vld [vmem:[%s5 + $0x28c] sm:$0xf]
    %v2061 = vld [vmem:[%s5 + $0x290] sm:$0xf]
    %v2062 = vld [vmem:[%s5 + $0x294] sm:$0xf]
    %v2063 = vld [vmem:[%s5 + $0x298] sm:$0xf]
    %v2064 = vld [vmem:[%s5 + $0x29c] sm:$0xf]
    %v2065 = vld [vmem:[%s5 + $0x2a0] sm:$0xf]
    %v2066 = vld [vmem:[%s5 + $0x2a4] sm:$0xf]
    %v2067 = vld [vmem:[%s5 + $0x2a8] sm:$0xf]
    %v2068 = vld [vmem:[%s5 + $0x2ac] sm:$0xf]
    %v2069 = vld [vmem:[%s5 + $0x2b0] sm:$0xf]
    %v2070 = vld [vmem:[%s5 + $0x2b4] sm:$0xf]
    %v2071 = vld [vmem:[%s5 + $0x2b8] sm:$0xf]
    %v2072 = vld [vmem:[%s5 + $0x2bc] sm:$0xf]
    %v2073 = vld [vmem:[%s5 + $0x2c0] sm:$0xf]
    %v2074 = vld [vmem:[%s5 + $0x2c4] sm:$0xf]
    %v2075 = vld [vmem:[%s5 + $0x2c8] sm:$0xf]
    %v2076 = vld [vmem:[%s5 + $0x2cc] sm:$0xf]
    %v2077 = vld [vmem:[%s5 + $0x2d0] sm:$0xf]
    %v2078 = vld [vmem:[%s5 + $0x2d4] sm:$0xf]
    %v2079 = vld [vmem:[%s5 + $0x2d8] sm:$0xf]
    %v2080 = vld [vmem:[%s5 + $0x2dc] sm:$0xf]
    %v2081 = vld [vmem:[%s5 + $0x2e0] sm:$0xf]
    %v2082 = vld [vmem:[%s5 + $0x2e4] sm:$0xf]
    %v2083 = vld [vmem:[%s5 + $0x2e8] sm:$0xf]
    %v2084 = vld [vmem:[%s5 + $0x2ec] sm:$0xf]
    %v2085 = vld [vmem:[%s5 + $0x2f0] sm:$0xf]
    %v2086 = vld [vmem:[%s5 + $0x2f4] sm:$0xf]
    %v2087 = vld [vmem:[%s5 + $0x2f8] sm:$0xf]
    %v2088 = vld [vmem:[%s5 + $0x2fc] sm:$0xf]
    %v2089 = vld [vmem:[%s4] sm:$0xff]
    %v2090 = vld [vmem:[%s4 + $0x8] sm:$0xf]
    %v2091 = vld [vmem:[#allocation4] sm:$0xf]
    %v2092 = vld [vmem:[#allocation4 + $0x4] sm:$0xf]
    %v2093 = vld [vmem:[#allocation4 + $0x8] sm:$0xf]
    %v2094 = vld [vmem:[#allocation4 + $0xc] sm:$0xf]
    %v2095 = vld [vmem:[#allocation4 + $0x10] sm:$0xf]
    %v2096 = vld [vmem:[#allocation4 + $0x14] sm:$0xf]
    %v2097 = vld [vmem:[#allocation4 + $0x18] sm:$0xf]
    %v2098 = vld [vmem:[#allocation4 + $0x1c] sm:$0xf]
    %v2099 = vld [vmem:[#allocation4 + $0x20] sm:$0xf]
    %v2100 = vld [vmem:[#allocation4 + $0x24] sm:$0xf]
    %v2101 = vld [vmem:[#allocation4 + $0x28] sm:$0xf]
    %v2102 = vld [vmem:[#allocation4 + $0x2c] sm:$0xf]
    %v2103 = vld [vmem:[#allocation4 + $0x30] sm:$0xf]
    %v2104 = vld [vmem:[#allocation4 + $0x34] sm:$0xf]
    %v2105 = vld [vmem:[#allocation4 + $0x38] sm:$0xf]
    %v2106 = vld [vmem:[#allocation4 + $0x3c] sm:$0xf]
    %v2107 = vld [vmem:[#allocation4 + $0x40] sm:$0xf]
    %v2108 = vld [vmem:[#allocation4 + $0x44] sm:$0xf]
    %v2109 = vld [vmem:[#allocation4 + $0x48] sm:$0xf]
    %v2110 = vld [vmem:[#allocation4 + $0x4c] sm:$0xf]
    %v2111 = vld [vmem:[#allocation4 + $0x50] sm:$0xf]
    %v2112 = vld [vmem:[#allocation4 + $0x54] sm:$0xf]
    %v2113 = vld [vmem:[#allocation4 + $0x58] sm:$0xf]
    %v2114 = vld [vmem:[#allocation4 + $0x5c] sm:$0xf]
    %v2115 = vld [vmem:[#allocation4 + $0x60] sm:$0xf]
    %v2116 = vld [vmem:[#allocation4 + $0x64] sm:$0xf]
    %v2117 = vld [vmem:[#allocation4 + $0x68] sm:$0xf]
    %v2118 = vld [vmem:[#allocation4 + $0x6c] sm:$0xf]
    %v2119 = vld [vmem:[#allocation4 + $0x70] sm:$0xf]
    %v2120 = vld [vmem:[#allocation4 + $0x74] sm:$0xf]
    %v2121 = vld [vmem:[#allocation4 + $0x78] sm:$0xf]
    %v2122 = vld [vmem:[#allocation4 + $0x7c] sm:$0xf]
    %v2123 = vld [vmem:[#allocation4 + $0x80] sm:$0xf]
    %v2124 = vld [vmem:[#allocation4 + $0x84] sm:$0xf]
    %v2125 = vld [vmem:[#allocation4 + $0x88] sm:$0xf]
    %v2126 = vld [vmem:[#allocation4 + $0x8c] sm:$0xf]
    %v2127 = vld [vmem:[#allocation4 + $0x90] sm:$0xf]
    %v2128 = vld [vmem:[#allocation4 + $0x94] sm:$0xf]
    %v2129 = vld [vmem:[#allocation4 + $0x98] sm:$0xf]
    %v2130 = vld [vmem:[#allocation4 + $0x9c] sm:$0xf]
    %v2131 = vld [vmem:[#allocation4 + $0xa0] sm:$0xf]
    %v2132 = vld [vmem:[#allocation4 + $0xa4] sm:$0xf]
    %v2133 = vld [vmem:[#allocation4 + $0xa8] sm:$0xf]
    %v2134 = vld [vmem:[#allocation4 + $0xac] sm:$0xf]
    %v2135 = vld [vmem:[#allocation4 + $0xb0] sm:$0xf]
    %v2136 = vld [vmem:[#allocation4 + $0xb4] sm:$0xf]
    %v2137 = vld [vmem:[#allocation4 + $0xb8] sm:$0xf]
    %v2138 = vld [vmem:[#allocation4 + $0xbc] sm:$0xf]
    %v2141 = vunpack.c.l.b16 %v2089
    %v2142 = vunpack.c.h.b16 %v2089
    %v2143 = vunpack.c.l.b16 %v2090
    %v2144 = vpack.c.b16 %v2141, %v2141
    %v2145 = vpack.c.b16 %v2142, %v2142
    %v2146 = vpack.c.b16 %v2143, %v2143
    %v2198 = vunpack.c.l.b16 %v2091
    %v2199 = vunpack.c.l.b16 %v2092
    %v2200 = vunpack.c.l.b16 %v2093
    %v2201 = vunpack.c.l.b16 %v2094
    %v2202 = vunpack.c.l.b16 %v2095
    %v2203 = vunpack.c.l.b16 %v2096
    %v2204 = vunpack.c.l.b16 %v2097
    %v2205 = vunpack.c.l.b16 %v2098
    %v2206 = vunpack.c.l.b16 %v2099
    %v2207 = vunpack.c.l.b16 %v2100
    %v2208 = vunpack.c.l.b16 %v2101
    %v2209 = vunpack.c.l.b16 %v2102
    %v2210 = vunpack.c.l.b16 %v2103
    %v2211 = vunpack.c.l.b16 %v2104
    %v2212 = vunpack.c.l.b16 %v2105
    %v2213 = vunpack.c.l.b16 %v2106
    %v2214 = vunpack.c.l.b16 %v2107
    %v2215 = vunpack.c.l.b16 %v2108
    %v2216 = vunpack.c.l.b16 %v2109
    %v2217 = vunpack.c.l.b16 %v2110
    %v2218 = vunpack.c.l.b16 %v2111
    %v2219 = vunpack.c.l.b16 %v2112
    %v2220 = vunpack.c.l.b16 %v2113
    %v2221 = vunpack.c.l.b16 %v2114
    %v2222 = vunpack.c.l.b16 %v2115
    %v2223 = vunpack.c.l.b16 %v2116
    %v2224 = vunpack.c.l.b16 %v2117
    %v2225 = vunpack.c.l.b16 %v2118
    %v2226 = vunpack.c.l.b16 %v2119
    %v2227 = vunpack.c.l.b16 %v2120
    %v2228 = vunpack.c.l.b16 %v2121
    %v2229 = vunpack.c.l.b16 %v2122
    %v2230 = vunpack.c.l.b16 %v2123
    %v2231 = vunpack.c.l.b16 %v2124
    %v2232 = vunpack.c.l.b16 %v2125
    %v2233 = vunpack.c.l.b16 %v2126
    %v2234 = vunpack.c.l.b16 %v2127
    %v2235 = vunpack.c.l.b16 %v2128
    %v2236 = vunpack.c.l.b16 %v2129
    %v2237 = vunpack.c.l.b16 %v2130
    %v2238 = vunpack.c.l.b16 %v2131
    %v2239 = vunpack.c.l.b16 %v2132
    %v2240 = vunpack.c.l.b16 %v2133
    %v2241 = vunpack.c.l.b16 %v2134
    %v2242 = vunpack.c.l.b16 %v2135
    %v2243 = vunpack.c.l.b16 %v2136
    %v2244 = vunpack.c.l.b16 %v2137
    %v2245 = vunpack.c.l.b16 %v2138
    %v2246 = vpack.c.b16 %v2199, %v2198
    %v2247 = vpack.c.b16 %v2201, %v2200
    %v2248 = vpack.c.b16 %v2203, %v2202
    %v2249 = vpack.c.b16 %v2205, %v2204
    %v2250 = vpack.c.b16 %v2207, %v2206
    %v2251 = vpack.c.b16 %v2209, %v2208
    %v2252 = vpack.c.b16 %v2211, %v2210
    %v2253 = vpack.c.b16 %v2213, %v2212
    %v2254 = vpack.c.b16 %v2215, %v2214
    %v2255 = vpack.c.b16 %v2217, %v2216
    %v2256 = vpack.c.b16 %v2219, %v2218
    %v2257 = vpack.c.b16 %v2221, %v2220
    %v2258 = vpack.c.b16 %v2223, %v2222
    %v2259 = vpack.c.b16 %v2225, %v2224
    %v2260 = vpack.c.b16 %v2227, %v2226
    %v2261 = vpack.c.b16 %v2229, %v2228
    %v2262 = vpack.c.b16 %v2231, %v2230
    %v2263 = vpack.c.b16 %v2233, %v2232
    %v2264 = vpack.c.b16 %v2235, %v2234
    %v2265 = vpack.c.b16 %v2237, %v2236
    %v2266 = vpack.c.b16 %v2239, %v2238
    %v2267 = vpack.c.b16 %v2241, %v2240
    %v2268 = vpack.c.b16 %v2243, %v2242
    %v2269 = vpack.c.b16 %v2245, %v2244
    %2294 = vmatprep.subr.bf16.mxu0 0
    %2295 = vmatpush1.bf16.msra.mxu0 %v2253
    %2296 = vmatprep.subr.bf16.mxu0 0
    %2297 = vmatpush1.bf16.msra.mxu0 %v2252
    %2298 = vmatprep.subr.bf16.mxu0 0
    %2299 = vmatpush1.bf16.msra.mxu0 %v2251
    %2300 = vmatprep.subr.bf16.mxu0 0
    %2301 = vmatpush1.bf16.msra.mxu0 %v2250
    %2302 = vmatprep.subr.bf16.mxu0 0
    %2303 = vmatpush1.bf16.msra.mxu0 %v2249
    %2304 = vmatprep.subr.bf16.mxu0 0
    %2305 = vmatpush1.bf16.msra.mxu0 %v2248
    %2306 = vmatprep.subr.bf16.mxu0 0
    %2307 = vmatpush1.bf16.msra.mxu0 %v2247
    %2308 = vmatprep.subr.bf16.mxu0 0
    %2309 = vmatpush1.bf16.msra.mxu0 %v2246
    %2310 = vmatprep.subr.bf16.mxu0 0
    %2311 = vmatpush2.bf16.msra.mxu0 %v2261
    %2312 = vmatprep.subr.bf16.mxu0 0
    %2313 = vmatpush2.bf16.msra.mxu0 %v2260
    %2314 = vmatprep.subr.bf16.mxu0 0
    %2315 = vmatpush2.bf16.msra.mxu0 %v2259
    %2316 = vmatprep.subr.bf16.mxu0 0
    %2317 = vmatpush2.bf16.msra.mxu0 %v2258
    %2318 = vmatprep.subr.bf16.mxu0 0
    %2319 = vmatpush2.bf16.msra.mxu0 %v2257
    %2320 = vmatprep.subr.bf16.mxu0 0
    %2321 = vmatpush2.bf16.msra.mxu0 %v2256
    %2322 = vmatprep.subr.bf16.mxu0 0
    %2323 = vmatpush2.bf16.msra.mxu0 %v2255
    %2324 = vmatprep.subr.bf16.mxu0 0
    %2325 = vmatpush2.bf16.msra.mxu0 %v2254
    %2326 = vmatprep.mubr.bf16.mxu0 %v2145
    %2327 = vmatmul.mubr.bf16.gmra.mxu0 %v2144
    %v2328 = vpop.f32.mrf.mxu0
    %v2329 = vadd.f32 0.0, %v2328
    %v2330 = vpop.f32.mrf.mxu0
    %v2331 = vpop.f32.mrf.mxu0
    %v2332 = vpop.f32.mrf.mxu0
    %2333 = vdwg.mxu0
    %2334 = vmatprep.subr.bf16.mxu0 0
    %2335 = vmatpush1.bf16.msra.mxu0 %v2269
    %2336 = vmatprep.subr.bf16.mxu0 0
    %2337 = vmatpush1.bf16.msra.mxu0 %v2268
    %2338 = vmatprep.subr.bf16.mxu0 0
    %2339 = vmatpush1.bf16.msra.mxu0 %v2267
    %2340 = vmatprep.subr.bf16.mxu0 0
    %2341 = vmatpush1.bf16.msra.mxu0 %v2266
    %2342 = vmatprep.subr.bf16.mxu0 0
    %2343 = vmatpush1.bf16.msra.mxu0 %v2265
    %2344 = vmatprep.subr.bf16.mxu0 0
    %2345 = vmatpush1.bf16.msra.mxu0 %v2264
    %2346 = vmatprep.subr.bf16.mxu0 0
    %2347 = vmatpush1.bf16.msra.mxu0 %v2263
    %2348 = vmatprep.subr.bf16.mxu0 0
    %2349 = vmatpush1.bf16.msra.mxu0 %v2262
    %2350 = vmatprep.subr.bf16.mxu0 0
    %2351 = vmatpush2.bf16.msra.mxu0 0
    %2352 = vmatprep.subr.bf16.mxu0 0
    %2353 = vmatpush2.bf16.msra.mxu0 0
    %2354 = vmatprep.subr.bf16.mxu0 0
    %2355 = vmatpush2.bf16.msra.mxu0 0
    %2356 = vmatprep.subr.bf16.mxu0 0
    %2357 = vmatpush2.bf16.msra.mxu0 0
    %2358 = vmatprep.subr.bf16.mxu0 0
    %2359 = vmatpush2.bf16.msra.mxu0 0
    %2360 = vmatprep.subr.bf16.mxu0 0
    %2361 = vmatpush2.bf16.msra.mxu0 0
    %2362 = vmatprep.subr.bf16.mxu0 0
    %2363 = vmatpush2.bf16.msra.mxu0 0
    %2364 = vmatprep.subr.bf16.mxu0 0
    %2365 = vmatpush2.bf16.msra.mxu0 0
    %2366 = vmatprep.mubr.bf16.mxu0 0
    %2367 = vmatmul.mubr.bf16.gmra.mxu0 %v2146
    %v2368 = vpop.f32.mrf.mxu0
    %v2369 = vadd.f32 %v2329, %v2368
    %v2370 = vpop.f32.mrf.mxu0
    %v2371 = vpop.f32.mrf.mxu0
    %v2372 = vpop.f32.mrf.mxu0
    %2373 = vdwg.mxu0
    %v2566 = vunpack.c.l.b16 %v1897
    %v2567 = vunpack.c.l.b16 %v1898
    %v2568 = vunpack.c.l.b16 %v1899
    %v2569 = vunpack.c.l.b16 %v1900
    %v2570 = vunpack.c.l.b16 %v1901
    %v2571 = vunpack.c.l.b16 %v1902
    %v2572 = vunpack.c.l.b16 %v1903
    %v2573 = vunpack.c.l.b16 %v1904
    %v2574 = vunpack.c.l.b16 %v1905
    %v2575 = vunpack.c.l.b16 %v1906
    %v2576 = vunpack.c.l.b16 %v1907
    %v2577 = vunpack.c.l.b16 %v1908
    %v2578 = vunpack.c.l.b16 %v1909
    %v2579 = vunpack.c.l.b16 %v1910
    %v2580 = vunpack.c.l.b16 %v1911
    %v2581 = vunpack.c.l.b16 %v1912
    %v2582 = vunpack.c.l.b16 %v1913
    %v2583 = vunpack.c.l.b16 %v1914
    %v2584 = vunpack.c.l.b16 %v1915
    %v2585 = vunpack.c.l.b16 %v1916
    %v2586 = vunpack.c.l.b16 %v1917
    %v2587 = vunpack.c.l.b16 %v1918
    %v2588 = vunpack.c.l.b16 %v1919
    %v2589 = vunpack.c.l.b16 %v1920
    %v2590 = vunpack.c.l.b16 %v1921
    %v2591 = vunpack.c.l.b16 %v1922
    %v2592 = vunpack.c.l.b16 %v1923
    %v2593 = vunpack.c.l.b16 %v1924
    %v2594 = vunpack.c.l.b16 %v1925
    %v2595 = vunpack.c.l.b16 %v1926
    %v2596 = vunpack.c.l.b16 %v1927
    %v2597 = vunpack.c.l.b16 %v1928
    %v2598 = vunpack.c.l.b16 %v1929
    %v2599 = vunpack.c.l.b16 %v1930
    %v2600 = vunpack.c.l.b16 %v1931
    %v2601 = vunpack.c.l.b16 %v1932
    %v2602 = vunpack.c.l.b16 %v1933
    %v2603 = vunpack.c.l.b16 %v1934
    %v2604 = vunpack.c.l.b16 %v1935
    %v2605 = vunpack.c.l.b16 %v1936
    %v2606 = vunpack.c.l.b16 %v1937
    %v2607 = vunpack.c.l.b16 %v1938
    %v2608 = vunpack.c.l.b16 %v1939
    %v2609 = vunpack.c.l.b16 %v1940
    %v2610 = vunpack.c.l.b16 %v1941
    %v2611 = vunpack.c.l.b16 %v1942
    %v2612 = vunpack.c.l.b16 %v1943
    %v2613 = vunpack.c.l.b16 %v1944
    %v2614 = vunpack.c.l.b16 %v1945
    %v2615 = vunpack.c.l.b16 %v1946
    %v2616 = vunpack.c.l.b16 %v1947
    %v2617 = vunpack.c.l.b16 %v1948
    %v2618 = vunpack.c.l.b16 %v1949
    %v2619 = vunpack.c.l.b16 %v1950
    %v2620 = vunpack.c.l.b16 %v1951
    %v2621 = vunpack.c.l.b16 %v1952
    %v2622 = vunpack.c.l.b16 %v1953
    %v2623 = vunpack.c.l.b16 %v1954
    %v2624 = vunpack.c.l.b16 %v1955
    %v2625 = vunpack.c.l.b16 %v1956
    %v2626 = vunpack.c.l.b16 %v1957
    %v2627 = vunpack.c.l.b16 %v1958
    %v2628 = vunpack.c.l.b16 %v1959
    %v2629 = vunpack.c.l.b16 %v1960
    %v2630 = vunpack.c.l.b16 %v1961
    %v2631 = vunpack.c.l.b16 %v1962
    %v2632 = vunpack.c.l.b16 %v1963
    %v2633 = vunpack.c.l.b16 %v1964
    %v2634 = vunpack.c.l.b16 %v1965
    %v2635 = vunpack.c.l.b16 %v1966
    %v2636 = vunpack.c.l.b16 %v1967
    %v2637 = vunpack.c.l.b16 %v1968
    %v2638 = vunpack.c.l.b16 %v1969
    %v2639 = vunpack.c.l.b16 %v1970
    %v2640 = vunpack.c.l.b16 %v1971
    %v2641 = vunpack.c.l.b16 %v1972
    %v2642 = vunpack.c.l.b16 %v1973
    %v2643 = vunpack.c.l.b16 %v1974
    %v2644 = vunpack.c.l.b16 %v1975
    %v2645 = vunpack.c.l.b16 %v1976
    %v2646 = vunpack.c.l.b16 %v1977
    %v2647 = vunpack.c.l.b16 %v1978
    %v2648 = vunpack.c.l.b16 %v1979
    %v2649 = vunpack.c.l.b16 %v1980
    %v2650 = vunpack.c.l.b16 %v1981
    %v2651 = vunpack.c.l.b16 %v1982
    %v2652 = vunpack.c.l.b16 %v1983
    %v2653 = vunpack.c.l.b16 %v1984
    %v2654 = vunpack.c.l.b16 %v1985
    %v2655 = vunpack.c.l.b16 %v1986
    %v2656 = vunpack.c.l.b16 %v1987
    %v2657 = vunpack.c.l.b16 %v1988
    %v2658 = vunpack.c.l.b16 %v1989
    %v2659 = vunpack.c.l.b16 %v1990
    %v2660 = vunpack.c.l.b16 %v1991
    %v2661 = vunpack.c.l.b16 %v1992
    %v2662 = vunpack.c.l.b16 %v1993
    %v2663 = vunpack.c.l.b16 %v1994
    %v2664 = vunpack.c.l.b16 %v1995
    %v2665 = vunpack.c.l.b16 %v1996
    %v2666 = vunpack.c.l.b16 %v1997
    %v2667 = vunpack.c.l.b16 %v1998
    %v2668 = vunpack.c.l.b16 %v1999
    %v2669 = vunpack.c.l.b16 %v2000
    %v2670 = vunpack.c.l.b16 %v2001
    %v2671 = vunpack.c.l.b16 %v2002
    %v2672 = vunpack.c.l.b16 %v2003
    %v2673 = vunpack.c.l.b16 %v2004
    %v2674 = vunpack.c.l.b16 %v2005
    %v2675 = vunpack.c.l.b16 %v2006
    %v2676 = vunpack.c.l.b16 %v2007
    %v2677 = vunpack.c.l.b16 %v2008
    %v2678 = vunpack.c.l.b16 %v2009
    %v2679 = vunpack.c.l.b16 %v2010
    %v2680 = vunpack.c.l.b16 %v2011
    %v2681 = vunpack.c.l.b16 %v2012
    %v2682 = vunpack.c.l.b16 %v2013
    %v2683 = vunpack.c.l.b16 %v2014
    %v2684 = vunpack.c.l.b16 %v2015
    %v2685 = vunpack.c.l.b16 %v2016
    %v2686 = vunpack.c.l.b16 %v2017
    %v2687 = vunpack.c.l.b16 %v2018
    %v2688 = vunpack.c.l.b16 %v2019
    %v2689 = vunpack.c.l.b16 %v2020
    %v2690 = vunpack.c.l.b16 %v2021
    %v2691 = vunpack.c.l.b16 %v2022
    %v2692 = vunpack.c.l.b16 %v2023
    %v2693 = vunpack.c.l.b16 %v2024
    %v2694 = vunpack.c.l.b16 %v2025
    %v2695 = vunpack.c.l.b16 %v2026
    %v2696 = vunpack.c.l.b16 %v2027
    %v2697 = vunpack.c.l.b16 %v2028
    %v2698 = vunpack.c.l.b16 %v2029
    %v2699 = vunpack.c.l.b16 %v2030
    %v2700 = vunpack.c.l.b16 %v2031
    %v2701 = vunpack.c.l.b16 %v2032
    %v2702 = vunpack.c.l.b16 %v2033
    %v2703 = vunpack.c.l.b16 %v2034
    %v2704 = vunpack.c.l.b16 %v2035
    %v2705 = vunpack.c.l.b16 %v2036
    %v2706 = vunpack.c.l.b16 %v2037
    %v2707 = vunpack.c.l.b16 %v2038
    %v2708 = vunpack.c.l.b16 %v2039
    %v2709 = vunpack.c.l.b16 %v2040
    %v2710 = vunpack.c.l.b16 %v2041
    %v2711 = vunpack.c.l.b16 %v2042
    %v2712 = vunpack.c.l.b16 %v2043
    %v2713 = vunpack.c.l.b16 %v2044
    %v2714 = vunpack.c.l.b16 %v2045
    %v2715 = vunpack.c.l.b16 %v2046
    %v2716 = vunpack.c.l.b16 %v2047
    %v2717 = vunpack.c.l.b16 %v2048
    %v2718 = vunpack.c.l.b16 %v2049
    %v2719 = vunpack.c.l.b16 %v2050
    %v2720 = vunpack.c.l.b16 %v2051
    %v2721 = vunpack.c.l.b16 %v2052
    %v2722 = vunpack.c.l.b16 %v2053
    %v2723 = vunpack.c.l.b16 %v2054
    %v2724 = vunpack.c.l.b16 %v2055
    %v2725 = vunpack.c.l.b16 %v2056
    %v2726 = vunpack.c.l.b16 %v2057
    %v2727 = vunpack.c.l.b16 %v2058
    %v2728 = vunpack.c.l.b16 %v2059
    %v2729 = vunpack.c.l.b16 %v2060
    %v2730 = vunpack.c.l.b16 %v2061
    %v2731 = vunpack.c.l.b16 %v2062
    %v2732 = vunpack.c.l.b16 %v2063
    %v2733 = vunpack.c.l.b16 %v2064
    %v2734 = vunpack.c.l.b16 %v2065
    %v2735 = vunpack.c.l.b16 %v2066
    %v2736 = vunpack.c.l.b16 %v2067
    %v2737 = vunpack.c.l.b16 %v2068
    %v2738 = vunpack.c.l.b16 %v2069
    %v2739 = vunpack.c.l.b16 %v2070
    %v2740 = vunpack.c.l.b16 %v2071
    %v2741 = vunpack.c.l.b16 %v2072
    %v2742 = vunpack.c.l.b16 %v2073
    %v2743 = vunpack.c.l.b16 %v2074
    %v2744 = vunpack.c.l.b16 %v2075
    %v2745 = vunpack.c.l.b16 %v2076
    %v2746 = vunpack.c.l.b16 %v2077
    %v2747 = vunpack.c.l.b16 %v2078
    %v2748 = vunpack.c.l.b16 %v2079
    %v2749 = vunpack.c.l.b16 %v2080
    %v2750 = vunpack.c.l.b16 %v2081
    %v2751 = vunpack.c.l.b16 %v2082
    %v2752 = vunpack.c.l.b16 %v2083
    %v2753 = vunpack.c.l.b16 %v2084
    %v2754 = vunpack.c.l.b16 %v2085
    %v2755 = vunpack.c.l.b16 %v2086
    %v2756 = vunpack.c.l.b16 %v2087
    %v2757 = vunpack.c.l.b16 %v2088
    %v2758 = vpack.c.b16 %v2567, %v2566
    %v2759 = vpack.c.b16 %v2569, %v2568
    %v2760 = vpack.c.b16 %v2571, %v2570
    %v2761 = vpack.c.b16 %v2573, %v2572
    %v2762 = vpack.c.b16 %v2575, %v2574
    %v2763 = vpack.c.b16 %v2577, %v2576
    %v2764 = vpack.c.b16 %v2579, %v2578
    %v2765 = vpack.c.b16 %v2581, %v2580
    %v2766 = vpack.c.b16 %v2583, %v2582
    %v2767 = vpack.c.b16 %v2585, %v2584
    %v2768 = vpack.c.b16 %v2587, %v2586
    %v2769 = vpack.c.b16 %v2589, %v2588
    %v2770 = vpack.c.b16 %v2591, %v2590
    %v2771 = vpack.c.b16 %v2593, %v2592
    %v2772 = vpack.c.b16 %v2595, %v2594
    %v2773 = vpack.c.b16 %v2597, %v2596
    %v2774 = vpack.c.b16 %v2599, %v2598
    %v2775 = vpack.c.b16 %v2601, %v2600
    %v2776 = vpack.c.b16 %v2603, %v2602
    %v2777 = vpack.c.b16 %v2605, %v2604
    %v2778 = vpack.c.b16 %v2607, %v2606
    %v2779 = vpack.c.b16 %v2609, %v2608
    %v2780 = vpack.c.b16 %v2611, %v2610
    %v2781 = vpack.c.b16 %v2613, %v2612
    %v2782 = vpack.c.b16 %v2615, %v2614
    %v2783 = vpack.c.b16 %v2617, %v2616
    %v2784 = vpack.c.b16 %v2619, %v2618
    %v2785 = vpack.c.b16 %v2621, %v2620
    %v2786 = vpack.c.b16 %v2623, %v2622
    %v2787 = vpack.c.b16 %v2625, %v2624
    %v2788 = vpack.c.b16 %v2627, %v2626
    %v2789 = vpack.c.b16 %v2629, %v2628
    %v2790 = vpack.c.b16 %v2631, %v2630
    %v2791 = vpack.c.b16 %v2633, %v2632
    %v2792 = vpack.c.b16 %v2635, %v2634
    %v2793 = vpack.c.b16 %v2637, %v2636
    %v2794 = vpack.c.b16 %v2639, %v2638
    %v2795 = vpack.c.b16 %v2641, %v2640
    %v2796 = vpack.c.b16 %v2643, %v2642
    %v2797 = vpack.c.b16 %v2645, %v2644
    %v2798 = vpack.c.b16 %v2647, %v2646
    %v2799 = vpack.c.b16 %v2649, %v2648
    %v2800 = vpack.c.b16 %v2651, %v2650
    %v2801 = vpack.c.b16 %v2653, %v2652
    %v2802 = vpack.c.b16 %v2655, %v2654
    %v2803 = vpack.c.b16 %v2657, %v2656
    %v2804 = vpack.c.b16 %v2659, %v2658
    %v2805 = vpack.c.b16 %v2661, %v2660
    %v2806 = vpack.c.b16 %v2663, %v2662
    %v2807 = vpack.c.b16 %v2665, %v2664
    %v2808 = vpack.c.b16 %v2667, %v2666
    %v2809 = vpack.c.b16 %v2669, %v2668
    %v2810 = vpack.c.b16 %v2671, %v2670
    %v2811 = vpack.c.b16 %v2673, %v2672
    %v2812 = vpack.c.b16 %v2675, %v2674
    %v2813 = vpack.c.b16 %v2677, %v2676
    %v2814 = vpack.c.b16 %v2679, %v2678
    %v2815 = vpack.c.b16 %v2681, %v2680
    %v2816 = vpack.c.b16 %v2683, %v2682
    %v2817 = vpack.c.b16 %v2685, %v2684
    %v2818 = vpack.c.b16 %v2687, %v2686
    %v2819 = vpack.c.b16 %v2689, %v2688
    %v2820 = vpack.c.b16 %v2691, %v2690
    %v2821 = vpack.c.b16 %v2693, %v2692
    %v2822 = vpack.c.b16 %v2695, %v2694
    %v2823 = vpack.c.b16 %v2697, %v2696
    %v2824 = vpack.c.b16 %v2699, %v2698
    %v2825 = vpack.c.b16 %v2701, %v2700
    %v2826 = vpack.c.b16 %v2703, %v2702
    %v2827 = vpack.c.b16 %v2705, %v2704
    %v2828 = vpack.c.b16 %v2707, %v2706
    %v2829 = vpack.c.b16 %v2709, %v2708
    %v2830 = vpack.c.b16 %v2711, %v2710
    %v2831 = vpack.c.b16 %v2713, %v2712
    %v2832 = vpack.c.b16 %v2715, %v2714
    %v2833 = vpack.c.b16 %v2717, %v2716
    %v2834 = vpack.c.b16 %v2719, %v2718
    %v2835 = vpack.c.b16 %v2721, %v2720
    %v2836 = vpack.c.b16 %v2723, %v2722
    %v2837 = vpack.c.b16 %v2725, %v2724
    %v2838 = vpack.c.b16 %v2727, %v2726
    %v2839 = vpack.c.b16 %v2729, %v2728
    %v2840 = vpack.c.b16 %v2731, %v2730
    %v2841 = vpack.c.b16 %v2733, %v2732
    %v2842 = vpack.c.b16 %v2735, %v2734
    %v2843 = vpack.c.b16 %v2737, %v2736
    %v2844 = vpack.c.b16 %v2739, %v2738
    %v2845 = vpack.c.b16 %v2741, %v2740
    %v2846 = vpack.c.b16 %v2743, %v2742
    %v2847 = vpack.c.b16 %v2745, %v2744
    %v2848 = vpack.c.b16 %v2747, %v2746
    %v2849 = vpack.c.b16 %v2749, %v2748
    %v2850 = vpack.c.b16 %v2751, %v2750
    %v2851 = vpack.c.b16 %v2753, %v2752
    %v2852 = vpack.c.b16 %v2755, %v2754
    %v2853 = vpack.c.b16 %v2757, %v2756
    %2950 = vmatprep.subr.bf16.mxu0 0
    %2951 = vmatpush1.bf16.msra.mxu0 %v2765
    %2952 = vmatprep.subr.bf16.mxu0 0
    %2953 = vmatpush1.bf16.msra.mxu0 %v2764
    %2954 = vmatprep.subr.bf16.mxu0 0
    %2955 = vmatpush1.bf16.msra.mxu0 %v2763
    %2956 = vmatprep.subr.bf16.mxu0 0
    %2957 = vmatpush1.bf16.msra.mxu0 %v2762
    %2958 = vmatprep.subr.bf16.mxu0 0
    %2959 = vmatpush1.bf16.msra.mxu0 %v2761
    %2960 = vmatprep.subr.bf16.mxu0 0
    %2961 = vmatpush1.bf16.msra.mxu0 %v2760
    %2962 = vmatprep.subr.bf16.mxu0 0
    %2963 = vmatpush1.bf16.msra.mxu0 %v2759
    %2964 = vmatprep.subr.bf16.mxu0 0
    %2965 = vmatpush1.bf16.msra.mxu0 %v2758
    %2966 = vmatprep.subr.bf16.mxu0 0
    %2967 = vmatpush2.bf16.msra.mxu0 %v2773
    %2968 = vmatprep.subr.bf16.mxu0 0
    %2969 = vmatpush2.bf16.msra.mxu0 %v2772
    %2970 = vmatprep.subr.bf16.mxu0 0
    %2971 = vmatpush2.bf16.msra.mxu0 %v2771
    %2972 = vmatprep.subr.bf16.mxu0 0
    %2973 = vmatpush2.bf16.msra.mxu0 %v2770
    %2974 = vmatprep.subr.bf16.mxu0 0
    %2975 = vmatpush2.bf16.msra.mxu0 %v2769
    %2976 = vmatprep.subr.bf16.mxu0 0
    %2977 = vmatpush2.bf16.msra.mxu0 %v2768
    %2978 = vmatprep.subr.bf16.mxu0 0
    %2979 = vmatpush2.bf16.msra.mxu0 %v2767
    %2980 = vmatprep.subr.bf16.mxu0 0
    %2981 = vmatpush2.bf16.msra.mxu0 %v2766
    %2982 = vmatprep.mubr.bf16.mxu0 %v1886
    %2983 = vmatmul.mubr.bf16.gmra.mxu0 %v1885
    %v2984 = vpop.f32.mrf.mxu0
    %v2985 = vadd.f32 %v2369, %v2984
    %v2986 = vpop.f32.mrf.mxu0
    %v2987 = vpop.f32.mrf.mxu0
    %v2988 = vpop.f32.mrf.mxu0
    %2989 = vdwg.mxu0
    %2990 = vmatprep.subr.bf16.mxu0 0
    %2991 = vmatpush1.bf16.msra.mxu0 %v2781
    %2992 = vmatprep.subr.bf16.mxu0 0
    %2993 = vmatpush1.bf16.msra.mxu0 %v2780
    %2994 = vmatprep.subr.bf16.mxu0 0
    %2995 = vmatpush1.bf16.msra.mxu0 %v2779
    %2996 = vmatprep.subr.bf16.mxu0 0
    %2997 = vmatpush1.bf16.msra.mxu0 %v2778
    %2998 = vmatprep.subr.bf16.mxu0 0
    %2999 = vmatpush1.bf16.msra.mxu0 %v2777
    %3000 = vmatprep.subr.bf16.mxu0 0
    %3001 = vmatpush1.bf16.msra.mxu0 %v2776
    %3002 = vmatprep.subr.bf16.mxu0 0
    %3003 = vmatpush1.bf16.msra.mxu0 %v2775
    %3004 = vmatprep.subr.bf16.mxu0 0
    %3005 = vmatpush1.bf16.msra.mxu0 %v2774
    %3006 = vmatprep.subr.bf16.mxu0 0
    %3007 = vmatpush2.bf16.msra.mxu0 %v2789
    %3008 = vmatprep.subr.bf16.mxu0 0
    %3009 = vmatpush2.bf16.msra.mxu0 %v2788
    %3010 = vmatprep.subr.bf16.mxu0 0
    %3011 = vmatpush2.bf16.msra.mxu0 %v2787
    %3012 = vmatprep.subr.bf16.mxu0 0
    %3013 = vmatpush2.bf16.msra.mxu0 %v2786
    %3014 = vmatprep.subr.bf16.mxu0 0
    %3015 = vmatpush2.bf16.msra.mxu0 %v2785
    %3016 = vmatprep.subr.bf16.mxu0 0
    %3017 = vmatpush2.bf16.msra.mxu0 %v2784
    %3018 = vmatprep.subr.bf16.mxu0 0
    %3019 = vmatpush2.bf16.msra.mxu0 %v2783
    %3020 = vmatprep.subr.bf16.mxu0 0
    %3021 = vmatpush2.bf16.msra.mxu0 %v2782
    %3022 = vmatprep.mubr.bf16.mxu0 %v1888
    %3023 = vmatmul.mubr.bf16.gmra.mxu0 %v1887
    %v3024 = vpop.f32.mrf.mxu0
    %v3025 = vadd.f32 %v2985, %v3024
    %v3026 = vpop.f32.mrf.mxu0
    %v3027 = vpop.f32.mrf.mxu0
    %v3028 = vpop.f32.mrf.mxu0
    %3029 = vdwg.mxu0
    %3030 = vmatprep.subr.bf16.mxu0 0
    %3031 = vmatpush1.bf16.msra.mxu0 %v2797
    %3032 = vmatprep.subr.bf16.mxu0 0
    %3033 = vmatpush1.bf16.msra.mxu0 %v2796
    %3034 = vmatprep.subr.bf16.mxu0 0
    %3035 = vmatpush1.bf16.msra.mxu0 %v2795
    %3036 = vmatprep.subr.bf16.mxu0 0
    %3037 = vmatpush1.bf16.msra.mxu0 %v2794
    %3038 = vmatprep.subr.bf16.mxu0 0
    %3039 = vmatpush1.bf16.msra.mxu0 %v2793
    %3040 = vmatprep.subr.bf16.mxu0 0
    %3041 = vmatpush1.bf16.msra.mxu0 %v2792
    %3042 = vmatprep.subr.bf16.mxu0 0
    %3043 = vmatpush1.bf16.msra.mxu0 %v2791
    %3044 = vmatprep.subr.bf16.mxu0 0
    %3045 = vmatpush1.bf16.msra.mxu0 %v2790
    %3046 = vmatprep.subr.bf16.mxu0 0
    %3047 = vmatpush2.bf16.msra.mxu0 %v2805
    %3048 = vmatprep.subr.bf16.mxu0 0
    %3049 = vmatpush2.bf16.msra.mxu0 %v2804
    %3050 = vmatprep.subr.bf16.mxu0 0
    %3051 = vmatpush2.bf16.msra.mxu0 %v2803
    %3052 = vmatprep.subr.bf16.mxu0 0
    %3053 = vmatpush2.bf16.msra.mxu0 %v2802
    %3054 = vmatprep.subr.bf16.mxu0 0
    %3055 = vmatpush2.bf16.msra.mxu0 %v2801
    %3056 = vmatprep.subr.bf16.mxu0 0
    %3057 = vmatpush2.bf16.msra.mxu0 %v2800
    %3058 = vmatprep.subr.bf16.mxu0 0
    %3059 = vmatpush2.bf16.msra.mxu0 %v2799
    %3060 = vmatprep.subr.bf16.mxu0 0
    %3061 = vmatpush2.bf16.msra.mxu0 %v2798
    %3062 = vmatprep.mubr.bf16.mxu0 %v1890
    %3063 = vmatmul.mubr.bf16.gmra.mxu0 %v1889
    %v3064 = vpop.f32.mrf.mxu0
    %v3065 = vadd.f32 %v3025, %v3064
    %v3066 = vpop.f32.mrf.mxu0
    %v3067 = vpop.f32.mrf.mxu0
    %v3068 = vpop.f32.mrf.mxu0
    %3069 = vdwg.mxu0
    %3070 = vmatprep.subr.bf16.mxu0 0
    %3071 = vmatpush1.bf16.msra.mxu0 %v2813
    %3072 = vmatprep.subr.bf16.mxu0 0
    %3073 = vmatpush1.bf16.msra.mxu0 %v2812
    %3074 = vmatprep.subr.bf16.mxu0 0
    %3075 = vmatpush1.bf16.msra.mxu0 %v2811
    %3076 = vmatprep.subr.bf16.mxu0 0
    %3077 = vmatpush1.bf16.msra.mxu0 %v2810
    %3078 = vmatprep.subr.bf16.mxu0 0
    %3079 = vmatpush1.bf16.msra.mxu0 %v2809
    %3080 = vmatprep.subr.bf16.mxu0 0
    %3081 = vmatpush1.bf16.msra.mxu0 %v2808
    %3082 = vmatprep.subr.bf16.mxu0 0
    %3083 = vmatpush1.bf16.msra.mxu0 %v2807
    %3084 = vmatprep.subr.bf16.mxu0 0
    %3085 = vmatpush1.bf16.msra.mxu0 %v2806
    %3086 = vmatprep.subr.bf16.mxu0 0
    %3087 = vmatpush2.bf16.msra.mxu0 %v2821
    %3088 = vmatprep.subr.bf16.mxu0 0
    %3089 = vmatpush2.bf16.msra.mxu0 %v2820
    %3090 = vmatprep.subr.bf16.mxu0 0
    %3091 = vmatpush2.bf16.msra.mxu0 %v2819
    %3092 = vmatprep.subr.bf16.mxu0 0
    %3093 = vmatpush2.bf16.msra.mxu0 %v2818
    %3094 = vmatprep.subr.bf16.mxu0 0
    %3095 = vmatpush2.bf16.msra.mxu0 %v2817
    %3096 = vmatprep.subr.bf16.mxu0 0
    %3097 = vmatpush2.bf16.msra.mxu0 %v2816
    %3098 = vmatprep.subr.bf16.mxu0 0
    %3099 = vmatpush2.bf16.msra.mxu0 %v2815
    %3100 = vmatprep.subr.bf16.mxu0 0
    %3101 = vmatpush2.bf16.msra.mxu0 %v2814
    %3102 = vmatprep.mubr.bf16.mxu0 %v1892
    %3103 = vmatmul.mubr.bf16.gmra.mxu0 %v1891
    %v3104 = vpop.f32.mrf.mxu0
    %v3105 = vadd.f32 %v3065, %v3104
    %v3106 = vpop.f32.mrf.mxu0
    %v3107 = vpop.f32.mrf.mxu0
    %v3108 = vpop.f32.mrf.mxu0
    %3109 = vdwg.mxu0
    %3110 = vmatprep.subr.bf16.mxu0 0
    %3111 = vmatpush1.bf16.msra.mxu0 %v2829
    %3112 = vmatprep.subr.bf16.mxu0 0
    %3113 = vmatpush1.bf16.msra.mxu0 %v2828
    %3114 = vmatprep.subr.bf16.mxu0 0
    %3115 = vmatpush1.bf16.msra.mxu0 %v2827
    %3116 = vmatprep.subr.bf16.mxu0 0
    %3117 = vmatpush1.bf16.msra.mxu0 %v2826
    %3118 = vmatprep.subr.bf16.mxu0 0
    %3119 = vmatpush1.bf16.msra.mxu0 %v2825
    %3120 = vmatprep.subr.bf16.mxu0 0
    %3121 = vmatpush1.bf16.msra.mxu0 %v2824
    %3122 = vmatprep.subr.bf16.mxu0 0
    %3123 = vmatpush1.bf16.msra.mxu0 %v2823
    %3124 = vmatprep.subr.bf16.mxu0 0
    %3125 = vmatpush1.bf16.msra.mxu0 %v2822
    %3126 = vmatprep.subr.bf16.mxu0 0
    %3127 = vmatpush2.bf16.msra.mxu0 %v2837
    %3128 = vmatprep.subr.bf16.mxu0 0
    %3129 = vmatpush2.bf16.msra.mxu0 %v2836
    %3130 = vmatprep.subr.bf16.mxu0 0
    %3131 = vmatpush2.bf16.msra.mxu0 %v2835
    %3132 = vmatprep.subr.bf16.mxu0 0
    %3133 = vmatpush2.bf16.msra.mxu0 %v2834
    %3134 = vmatprep.subr.bf16.mxu0 0
    %3135 = vmatpush2.bf16.msra.mxu0 %v2833
    %3136 = vmatprep.subr.bf16.mxu0 0
    %3137 = vmatpush2.bf16.msra.mxu0 %v2832
    %3138 = vmatprep.subr.bf16.mxu0 0
    %3139 = vmatpush2.bf16.msra.mxu0 %v2831
    %3140 = vmatprep.subr.bf16.mxu0 0
    %3141 = vmatpush2.bf16.msra.mxu0 %v2830
    %3142 = vmatprep.mubr.bf16.mxu0 %v1894
    %3143 = vmatmul.mubr.bf16.gmra.mxu0 %v1893
    %v3144 = vpop.f32.mrf.mxu0
    %v3145 = vadd.f32 %v3105, %v3144
    %v3146 = vpop.f32.mrf.mxu0
    %v3147 = vpop.f32.mrf.mxu0
    %v3148 = vpop.f32.mrf.mxu0
    %3149 = vdwg.mxu0
    %3150 = vmatprep.subr.bf16.mxu0 0
    %3151 = vmatpush1.bf16.msra.mxu0 %v2845
    %3152 = vmatprep.subr.bf16.mxu0 0
    %3153 = vmatpush1.bf16.msra.mxu0 %v2844
    %3154 = vmatprep.subr.bf16.mxu0 0
    %3155 = vmatpush1.bf16.msra.mxu0 %v2843
    %3156 = vmatprep.subr.bf16.mxu0 0
    %3157 = vmatpush1.bf16.msra.mxu0 %v2842
    %3158 = vmatprep.subr.bf16.mxu0 0
    %3159 = vmatpush1.bf16.msra.mxu0 %v2841
    %3160 = vmatprep.subr.bf16.mxu0 0
    %3161 = vmatpush1.bf16.msra.mxu0 %v2840
    %3162 = vmatprep.subr.bf16.mxu0 0
    %3163 = vmatpush1.bf16.msra.mxu0 %v2839
    %3164 = vmatprep.subr.bf16.mxu0 0
    %3165 = vmatpush1.bf16.msra.mxu0 %v2838
    %3166 = vmatprep.subr.bf16.mxu0 0
    %3167 = vmatpush2.bf16.msra.mxu0 %v2853
    %3168 = vmatprep.subr.bf16.mxu0 0
    %3169 = vmatpush2.bf16.msra.mxu0 %v2852
    %3170 = vmatprep.subr.bf16.mxu0 0
    %3171 = vmatpush2.bf16.msra.mxu0 %v2851
    %3172 = vmatprep.subr.bf16.mxu0 0
    %3173 = vmatpush2.bf16.msra.mxu0 %v2850
    %3174 = vmatprep.subr.bf16.mxu0 0
    %3175 = vmatpush2.bf16.msra.mxu0 %v2849
    %3176 = vmatprep.subr.bf16.mxu0 0
    %3177 = vmatpush2.bf16.msra.mxu0 %v2848
    %3178 = vmatprep.subr.bf16.mxu0 0
    %3179 = vmatpush2.bf16.msra.mxu0 %v2847
    %3180 = vmatprep.subr.bf16.mxu0 0
    %3181 = vmatpush2.bf16.msra.mxu0 %v2846
    %3182 = vmatprep.mubr.bf16.mxu0 %v1896
    %3183 = vmatmul.mubr.bf16.gmra.mxu0 %v1895
    %v3184 = vpop.f32.mrf.mxu0
    %v3185 = vadd.f32 %v3145, %v3184
    %v3186 = vpop.f32.mrf.mxu0
    %v3187 = vpop.f32.mrf.mxu0
    %v3188 = vpop.f32.mrf.mxu0
    %3189 = vdwg.mxu0
    %v3190 = vld [vmem:[%s7] sm:$0x1]
    %v3192 = vlaneseq
    %v3193 = vshrl.u32 %v3192, 7
    %v3194 = vsub.s32 0, %v3193
    %v3195 = vrot.slane %v3190, %v3194
    %v3197 = vadd.f32 %v3185, %v3195
    %3198 = vst [vmem:[%s8] sm:$0xff] %v3197
    // Predicated region
    $region42: #{model_forward.1} parent=1 // pred_check
      _
    $region43: #{model_forward.1} parent=1 // pred_check_branch
      %3200 = sbr.rel (0) target = $region45
    $region44: #{model_forward.1} parent=1 // pred_region
      _
    $region45: #{model_forward.1} parent=1 // pred_fallthru
      _
    // Predicated region
    $region46: #{model_forward.1} parent=1 // pred_check
      _
    $region47: #{model_forward.1} parent=1 // pred_check_branch
      %3202 = sbr.rel (0) target = $region49
    $region48: #{model_forward.1} parent=1 // pred_region
      _
    $region49: #{model_forward.1} parent=1 // pred_fallthru
      _
    %3203 = vsyncpa [#allocation3], 1
    %3204 = vsyncpa [#allocation5], 1

</llo_original>
